<compile_context>
chip_gen: v7x
topology: tpu7x:2x2x1
jax: 0.10.0
libtpu: 0.0.40
codegen_flags: <defaults>
</compile_context>

<pallas_src>
import jax
import jax.numpy as jnp
from jax.experimental import pallas as pl
from jax.experimental.pallas import tpu as pltpu

HIDDEN = 10          # layer_sizes = [1, 10, 1]
LANE = 1024          # lane-dense tile width (multiple of 128)
MAX_BLOCK_ROWS = 512 # 512*1024*4B = 2 MiB per buffer (safe on v5e..v7x)


def fittorch_kernel(x_ref, p_ref, o_ref):
    """x_ref/o_ref: (block_rows, LANE) f32 VMEM tiles.
    p_ref: (3*HIDDEN+1,) f32 in SMEM = [a | c | w2 | b2]."""
    x = x_ref[...]                                  # lane-dense activation tile
    acc = jnp.full_like(x, p_ref[3 * HIDDEN])       # start from output bias b2
    for k in range(HIDDEN):                         # unrolled: 10 FMA + softplus
        z = p_ref[k] * x + p_ref[HIDDEN + k]        # fused Linear(1,1)+Linear(1,10)
        # Numerically stable softplus (matches torch.nn.Softplus, beta=1).
        # TODO(synk): bf16 exp/log1p on v6e/v7x EUP would ~2x throughput but
        # diverges bitwise from the f32 torch reference; kept f32.
        sp = jnp.maximum(z, 0.0) + jnp.log1p(jnp.exp(-jnp.abs(z)))
        acc = acc + p_ref[2 * HIDDEN + k] * sp      # Linear(10,1) contraction
    o_ref[...] = acc                                # single unmasked lane-dense store


def fittorch_forward(x, params):
    """x: (ndata, 1) float32.  params stored pre-transposed as (in, out)."""
    n, nfeat = x.shape
    assert nfeat == 1, "FitTorch([1,10,1]) expects a single input feature"

    # ---- fuse Linear(1,1) into Linear(1,10) on the host side ----
    w0 = params["w0"].reshape(())                   # scalar
    b0 = params["b0"].reshape(())
    w1 = params["w1"].reshape(HIDDEN)               # (10,)
    b1 = params["b1"].reshape(HIDDEN)
    a = (w1 * w0).astype(jnp.float32)               # pre-activation scale   (10,)
    c = (w1 * b0 + b1).astype(jnp.float32)          # pre-activation offset  (10,)
    w2 = params["w2"].reshape(HIDDEN).astype(jnp.float32)   # (10,)
    b2 = params["b2"].reshape(1).astype(jnp.float32)        # (1,)
    p = jnp.concatenate([a, c, w2, b2])             # (31,) packed SMEM params

    # ---- lane-dense layout: (N,1) -> (padded_rows, LANE) ----
    rows_needed = pl.cdiv(max(n, 1), LANE)
    block_rows = min(MAX_BLOCK_ROWS, ((rows_needed + 7) // 8) * 8)
    padded_rows = pl.cdiv(rows_needed, block_rows) * block_rows
    total = padded_rows * LANE

    x_flat = jnp.pad(jnp.ravel(x.astype(jnp.float32)), (0, total - n))
    x2d = x_flat.reshape(padded_rows, LANE)

    grid = (padded_rows // block_rows,)

    out2d = pl.pallas_call(
        fittorch_kernel,
        out_shape=jax.ShapeDtypeStruct((padded_rows, LANE), jnp.float32),
        grid=grid,
        in_specs=[
            pl.BlockSpec((block_rows, LANE), lambda i: (i, 0)),        # streamed x
            pl.BlockSpec(memory_space=pltpu.MemorySpace.SMEM),         # packed params
        ],
        out_specs=pl.BlockSpec((block_rows, LANE), lambda i: (i, 0)),
        compiler_params=pltpu.CompilerParams(
            dimension_semantics=("parallel",),          # 2 TCs on v7x
            vmem_limit_bytes=32 * 1024 * 1024,          # explicit, safe on v5e..v7x
        ),
    )(x2d, p)

    # Drop lane/row padding and restore (ndata, 1).
    return out2d.reshape(total)[:n].reshape(n, 1)


def init_params(key):
    """Deterministic init mimicking torch.nn.Linear (U(-1/sqrt(fan_in), +))."""
    ks = jax.random.split(key, 6)

    def lin(kw, kb, fan_in, fan_out):
        bound = 1.0 / jnp.sqrt(fan_in)
        # Stored already transposed: shape (in, out).
        w = jax.random.uniform(kw, (fan_in, fan_out), jnp.float32, -bound, bound)
        b = jax.random.uniform(kb, (1, fan_out), jnp.float32, -bound, bound)
        return w, b

    w0, b0 = lin(ks[0], ks[1], 1, 1)      # Linear(1, 1)
    w1, b1 = lin(ks[2], ks[3], 1, 10)     # Linear(1, 10)
    w2, b2 = lin(ks[4], ks[5], 10, 1)     # Linear(10, 1)
    return dict(w0=w0, b0=b0, w1=w1, b1=b1, w2=w2, b2=b2)


def reference_forward(x, p):
    h = x @ p["w0"] + p["b0"]
    h = h @ p["w1"] + p["b1"]
    h = jax.nn.softplus(h)
    return h @ p["w2"] + p["b2"]


if __name__ == "__main__":
    key = jax.random.PRNGKey(0)
    k_params, k_x = jax.random.split(key)

    params = init_params(k_params)
    ndata, nfeatures = 8, 1
    x = jax.random.normal(k_x, (ndata, nfeatures), jnp.float32)

    out = fittorch_forward(x, params)
    out = jax.block_until_ready(out)

    ref = reference_forward(x, params)
    assert out.shape == (ndata, 1)
    assert jnp.allclose(out, ref, atol=1e-5, rtol=1e-5)

    print("KERNEL_OK")
</pallas_src>

<mosaic_0001>
module attributes {stable_mosaic.version = 11 : i64} {
  func.func @fittorch_kernel(%arg0: i32, %arg1: memref<8x1024xf32, #tpu.memory_space<vmem>>, %arg2: memref<31xf32, #tpu.memory_space<smem>>, %arg3: memref<8x1024xf32, #tpu.memory_space<vmem>>) attributes {dimension_semantics = [#tpu.dimension_semantics<parallel>], iteration_bounds = array<i64: 1>, scalar_prefetch = 0 : i64, scratch_operands = 0 : i64, tpu.core_type = #tpu.core_type<tc>, window_params = [{transform_indices = @transform_0, window_bounds = array<i64: 8, 1024>}, {transform_indices = @transform_1, window_bounds = array<i64: 31>}, {transform_indices = @transform_2, window_bounds = array<i64: 8, 1024>}]} {
    %c0 = arith.constant 0 : index
    %c0_0 = arith.constant 0 : index
    %0 = vector.load %arg1[%c0, %c0_0] : memref<8x1024xf32, #tpu.memory_space<vmem>>, vector<8x1024xf32>
    %c30 = arith.constant 30 : index
    %1 = memref.load %arg2[%c30] : memref<31xf32, #tpu.memory_space<smem>>
    %2 = vector.broadcast %1 : f32 to vector<8x1024xf32>
    %c0_1 = arith.constant 0 : index
    %3 = memref.load %arg2[%c0_1] : memref<31xf32, #tpu.memory_space<smem>>
    %4 = vector.broadcast %3 : f32 to vector<8x1024xf32>
    %5 = arith.mulf %4, %0 : vector<8x1024xf32>
    %c10 = arith.constant 10 : index
    %6 = memref.load %arg2[%c10] : memref<31xf32, #tpu.memory_space<smem>>
    %7 = vector.broadcast %6 : f32 to vector<8x1024xf32>
    %8 = arith.addf %5, %7 : vector<8x1024xf32>
    %cst = arith.constant 0.000000e+00 : f32
    %9 = vector.broadcast %cst : f32 to vector<8x1024xf32>
    %10 = arith.maximumf %8, %9 : vector<8x1024xf32>
    %11 = math.absf %8 : vector<8x1024xf32>
    %cst_2 = arith.constant 0.000000e+00 : f32
    %12 = vector.broadcast %cst_2 : f32 to vector<8x1024xf32>
    %13 = arith.subf %12, %11 : vector<8x1024xf32>
    %14 = math.exp %13 : vector<8x1024xf32>
    %15 = math.log1p %14 : vector<8x1024xf32>
    %16 = arith.addf %10, %15 : vector<8x1024xf32>
    %c20 = arith.constant 20 : index
    %17 = memref.load %arg2[%c20] : memref<31xf32, #tpu.memory_space<smem>>
    %18 = vector.broadcast %17 : f32 to vector<8x1024xf32>
    %19 = arith.mulf %18, %16 : vector<8x1024xf32>
    %20 = arith.addf %2, %19 : vector<8x1024xf32>
    %c1 = arith.constant 1 : index
    %21 = memref.load %arg2[%c1] : memref<31xf32, #tpu.memory_space<smem>>
    %22 = vector.broadcast %21 : f32 to vector<8x1024xf32>
    %23 = arith.mulf %22, %0 : vector<8x1024xf32>
    %c11 = arith.constant 11 : index
    %24 = memref.load %arg2[%c11] : memref<31xf32, #tpu.memory_space<smem>>
    %25 = vector.broadcast %24 : f32 to vector<8x1024xf32>
    %26 = arith.addf %23, %25 : vector<8x1024xf32>
    %cst_3 = arith.constant 0.000000e+00 : f32
    %27 = vector.broadcast %cst_3 : f32 to vector<8x1024xf32>
    %28 = arith.maximumf %26, %27 : vector<8x1024xf32>
    %29 = math.absf %26 : vector<8x1024xf32>
    %cst_4 = arith.constant 0.000000e+00 : f32
    %30 = vector.broadcast %cst_4 : f32 to vector<8x1024xf32>
    %31 = arith.subf %30, %29 : vector<8x1024xf32>
    %32 = math.exp %31 : vector<8x1024xf32>
    %33 = math.log1p %32 : vector<8x1024xf32>
    %34 = arith.addf %28, %33 : vector<8x1024xf32>
    %c21 = arith.constant 21 : index
    %35 = memref.load %arg2[%c21] : memref<31xf32, #tpu.memory_space<smem>>
    %36 = vector.broadcast %35 : f32 to vector<8x1024xf32>
    %37 = arith.mulf %36, %34 : vector<8x1024xf32>
    %38 = arith.addf %20, %37 : vector<8x1024xf32>
    %c2 = arith.constant 2 : index
    %39 = memref.load %arg2[%c2] : memref<31xf32, #tpu.memory_space<smem>>
    %40 = vector.broadcast %39 : f32 to vector<8x1024xf32>
    %41 = arith.mulf %40, %0 : vector<8x1024xf32>
    %c12 = arith.constant 12 : index
    %42 = memref.load %arg2[%c12] : memref<31xf32, #tpu.memory_space<smem>>
    %43 = vector.broadcast %42 : f32 to vector<8x1024xf32>
    %44 = arith.addf %41, %43 : vector<8x1024xf32>
    %cst_5 = arith.constant 0.000000e+00 : f32
    %45 = vector.broadcast %cst_5 : f32 to vector<8x1024xf32>
    %46 = arith.maximumf %44, %45 : vector<8x1024xf32>
    %47 = math.absf %44 : vector<8x1024xf32>
    %cst_6 = arith.constant 0.000000e+00 : f32
    %48 = vector.broadcast %cst_6 : f32 to vector<8x1024xf32>
    %49 = arith.subf %48, %47 : vector<8x1024xf32>
    %50 = math.exp %49 : vector<8x1024xf32>
    %51 = math.log1p %50 : vector<8x1024xf32>
    %52 = arith.addf %46, %51 : vector<8x1024xf32>
    %c22 = arith.constant 22 : index
    %53 = memref.load %arg2[%c22] : memref<31xf32, #tpu.memory_space<smem>>
    %54 = vector.broadcast %53 : f32 to vector<8x1024xf32>
    %55 = arith.mulf %54, %52 : vector<8x1024xf32>
    %56 = arith.addf %38, %55 : vector<8x1024xf32>
    %c3 = arith.constant 3 : index
    %57 = memref.load %arg2[%c3] : memref<31xf32, #tpu.memory_space<smem>>
    %58 = vector.broadcast %57 : f32 to vector<8x1024xf32>
    %59 = arith.mulf %58, %0 : vector<8x1024xf32>
    %c13 = arith.constant 13 : index
    %60 = memref.load %arg2[%c13] : memref<31xf32, #tpu.memory_space<smem>>
    %61 = vector.broadcast %60 : f32 to vector<8x1024xf32>
    %62 = arith.addf %59, %61 : vector<8x1024xf32>
    %cst_7 = arith.constant 0.000000e+00 : f32
    %63 = vector.broadcast %cst_7 : f32 to vector<8x1024xf32>
    %64 = arith.maximumf %62, %63 : vector<8x1024xf32>
    %65 = math.absf %62 : vector<8x1024xf32>
    %cst_8 = arith.constant 0.000000e+00 : f32
    %66 = vector.broadcast %cst_8 : f32 to vector<8x1024xf32>
    %67 = arith.subf %66, %65 : vector<8x1024xf32>
    %68 = math.exp %67 : vector<8x1024xf32>
    %69 = math.log1p %68 : vector<8x1024xf32>
    %70 = arith.addf %64, %69 : vector<8x1024xf32>
    %c23 = arith.constant 23 : index
    %71 = memref.load %arg2[%c23] : memref<31xf32, #tpu.memory_space<smem>>
    %72 = vector.broadcast %71 : f32 to vector<8x1024xf32>
    %73 = arith.mulf %72, %70 : vector<8x1024xf32>
    %74 = arith.addf %56, %73 : vector<8x1024xf32>
    %c4 = arith.constant 4 : index
    %75 = memref.load %arg2[%c4] : memref<31xf32, #tpu.memory_space<smem>>
    %76 = vector.broadcast %75 : f32 to vector<8x1024xf32>
    %77 = arith.mulf %76, %0 : vector<8x1024xf32>
    %c14 = arith.constant 14 : index
    %78 = memref.load %arg2[%c14] : memref<31xf32, #tpu.memory_space<smem>>
    %79 = vector.broadcast %78 : f32 to vector<8x1024xf32>
    %80 = arith.addf %77, %79 : vector<8x1024xf32>
    %cst_9 = arith.constant 0.000000e+00 : f32
    %81 = vector.broadcast %cst_9 : f32 to vector<8x1024xf32>
    %82 = arith.maximumf %80, %81 : vector<8x1024xf32>
    %83 = math.absf %80 : vector<8x1024xf32>
    %cst_10 = arith.constant 0.000000e+00 : f32
    %84 = vector.broadcast %cst_10 : f32 to vector<8x1024xf32>
    %85 = arith.subf %84, %83 : vector<8x1024xf32>
    %86 = math.exp %85 : vector<8x1024xf32>
    %87 = math.log1p %86 : vector<8x1024xf32>
    %88 = arith.addf %82, %87 : vector<8x1024xf32>
    %c24 = arith.constant 24 : index
    %89 = memref.load %arg2[%c24] : memref<31xf32, #tpu.memory_space<smem>>
    %90 = vector.broadcast %89 : f32 to vector<8x1024xf32>
    %91 = arith.mulf %90, %88 : vector<8x1024xf32>
    %92 = arith.addf %74, %91 : vector<8x1024xf32>
    %c5 = arith.constant 5 : index
    %93 = memref.load %arg2[%c5] : memref<31xf32, #tpu.memory_space<smem>>
    %94 = vector.broadcast %93 : f32 to vector<8x1024xf32>
    %95 = arith.mulf %94, %0 : vector<8x1024xf32>
    %c15 = arith.constant 15 : index
    %96 = memref.load %arg2[%c15] : memref<31xf32, #tpu.memory_space<smem>>
    %97 = vector.broadcast %96 : f32 to vector<8x1024xf32>
    %98 = arith.addf %95, %97 : vector<8x1024xf32>
    %cst_11 = arith.constant 0.000000e+00 : f32
    %99 = vector.broadcast %cst_11 : f32 to vector<8x1024xf32>
    %100 = arith.maximumf %98, %99 : vector<8x1024xf32>
    %101 = math.absf %98 : vector<8x1024xf32>
    %cst_12 = arith.constant 0.000000e+00 : f32
    %102 = vector.broadcast %cst_12 : f32 to vector<8x1024xf32>
    %103 = arith.subf %102, %101 : vector<8x1024xf32>
    %104 = math.exp %103 : vector<8x1024xf32>
    %105 = math.log1p %104 : vector<8x1024xf32>
    %106 = arith.addf %100, %105 : vector<8x1024xf32>
    %c25 = arith.constant 25 : index
    %107 = memref.load %arg2[%c25] : memref<31xf32, #tpu.memory_space<smem>>
    %108 = vector.broadcast %107 : f32 to vector<8x1024xf32>
    %109 = arith.mulf %108, %106 : vector<8x1024xf32>
    %110 = arith.addf %92, %109 : vector<8x1024xf32>
    %c6 = arith.constant 6 : index
    %111 = memref.load %arg2[%c6] : memref<31xf32, #tpu.memory_space<smem>>
    %112 = vector.broadcast %111 : f32 to vector<8x1024xf32>
    %113 = arith.mulf %112, %0 : vector<8x1024xf32>
    %c16 = arith.constant 16 : index
    %114 = memref.load %arg2[%c16] : memref<31xf32, #tpu.memory_space<smem>>
    %115 = vector.broadcast %114 : f32 to vector<8x1024xf32>
    %116 = arith.addf %113, %115 : vector<8x1024xf32>
    %cst_13 = arith.constant 0.000000e+00 : f32
    %117 = vector.broadcast %cst_13 : f32 to vector<8x1024xf32>
    %118 = arith.maximumf %116, %117 : vector<8x1024xf32>
    %119 = math.absf %116 : vector<8x1024xf32>
    %cst_14 = arith.constant 0.000000e+00 : f32
    %120 = vector.broadcast %cst_14 : f32 to vector<8x1024xf32>
    %121 = arith.subf %120, %119 : vector<8x1024xf32>
    %122 = math.exp %121 : vector<8x1024xf32>
    %123 = math.log1p %122 : vector<8x1024xf32>
    %124 = arith.addf %118, %123 : vector<8x1024xf32>
    %c26 = arith.constant 26 : index
    %125 = memref.load %arg2[%c26] : memref<31xf32, #tpu.memory_space<smem>>
    %126 = vector.broadcast %125 : f32 to vector<8x1024xf32>
    %127 = arith.mulf %126, %124 : vector<8x1024xf32>
    %128 = arith.addf %110, %127 : vector<8x1024xf32>
    %c7 = arith.constant 7 : index
    %129 = memref.load %arg2[%c7] : memref<31xf32, #tpu.memory_space<smem>>
    %130 = vector.broadcast %129 : f32 to vector<8x1024xf32>
    %131 = arith.mulf %130, %0 : vector<8x1024xf32>
    %c17 = arith.constant 17 : index
    %132 = memref.load %arg2[%c17] : memref<31xf32, #tpu.memory_space<smem>>
    %133 = vector.broadcast %132 : f32 to vector<8x1024xf32>
    %134 = arith.addf %131, %133 : vector<8x1024xf32>
    %cst_15 = arith.constant 0.000000e+00 : f32
    %135 = vector.broadcast %cst_15 : f32 to vector<8x1024xf32>
    %136 = arith.maximumf %134, %135 : vector<8x1024xf32>
    %137 = math.absf %134 : vector<8x1024xf32>
    %cst_16 = arith.constant 0.000000e+00 : f32
    %138 = vector.broadcast %cst_16 : f32 to vector<8x1024xf32>
    %139 = arith.subf %138, %137 : vector<8x1024xf32>
    %140 = math.exp %139 : vector<8x1024xf32>
    %141 = math.log1p %140 : vector<8x1024xf32>
    %142 = arith.addf %136, %141 : vector<8x1024xf32>
    %c27 = arith.constant 27 : index
    %143 = memref.load %arg2[%c27] : memref<31xf32, #tpu.memory_space<smem>>
    %144 = vector.broadcast %143 : f32 to vector<8x1024xf32>
    %145 = arith.mulf %144, %142 : vector<8x1024xf32>
    %146 = arith.addf %128, %145 : vector<8x1024xf32>
    %c8 = arith.constant 8 : index
    %147 = memref.load %arg2[%c8] : memref<31xf32, #tpu.memory_space<smem>>
    %148 = vector.broadcast %147 : f32 to vector<8x1024xf32>
    %149 = arith.mulf %148, %0 : vector<8x1024xf32>
    %c18 = arith.constant 18 : index
    %150 = memref.load %arg2[%c18] : memref<31xf32, #tpu.memory_space<smem>>
    %151 = vector.broadcast %150 : f32 to vector<8x1024xf32>
    %152 = arith.addf %149, %151 : vector<8x1024xf32>
    %cst_17 = arith.constant 0.000000e+00 : f32
    %153 = vector.broadcast %cst_17 : f32 to vector<8x1024xf32>
    %154 = arith.maximumf %152, %153 : vector<8x1024xf32>
    %155 = math.absf %152 : vector<8x1024xf32>
    %cst_18 = arith.constant 0.000000e+00 : f32
    %156 = vector.broadcast %cst_18 : f32 to vector<8x1024xf32>
    %157 = arith.subf %156, %155 : vector<8x1024xf32>
    %158 = math.exp %157 : vector<8x1024xf32>
    %159 = math.log1p %158 : vector<8x1024xf32>
    %160 = arith.addf %154, %159 : vector<8x1024xf32>
    %c28 = arith.constant 28 : index
    %161 = memref.load %arg2[%c28] : memref<31xf32, #tpu.memory_space<smem>>
    %162 = vector.broadcast %161 : f32 to vector<8x1024xf32>
    %163 = arith.mulf %162, %160 : vector<8x1024xf32>
    %164 = arith.addf %146, %163 : vector<8x1024xf32>
    %c9 = arith.constant 9 : index
    %165 = memref.load %arg2[%c9] : memref<31xf32, #tpu.memory_space<smem>>
    %166 = vector.broadcast %165 : f32 to vector<8x1024xf32>
    %167 = arith.mulf %166, %0 : vector<8x1024xf32>
    %c19 = arith.constant 19 : index
    %168 = memref.load %arg2[%c19] : memref<31xf32, #tpu.memory_space<smem>>
    %169 = vector.broadcast %168 : f32 to vector<8x1024xf32>
    %170 = arith.addf %167, %169 : vector<8x1024xf32>
    %cst_19 = arith.constant 0.000000e+00 : f32
    %171 = vector.broadcast %cst_19 : f32 to vector<8x1024xf32>
    %172 = arith.maximumf %170, %171 : vector<8x1024xf32>
    %173 = math.absf %170 : vector<8x1024xf32>
    %cst_20 = arith.constant 0.000000e+00 : f32
    %174 = vector.broadcast %cst_20 : f32 to vector<8x1024xf32>
    %175 = arith.subf %174, %173 : vector<8x1024xf32>
    %176 = math.exp %175 : vector<8x1024xf32>
    %177 = math.log1p %176 : vector<8x1024xf32>
    %178 = arith.addf %172, %177 : vector<8x1024xf32>
    %c29 = arith.constant 29 : index
    %179 = memref.load %arg2[%c29] : memref<31xf32, #tpu.memory_space<smem>>
    %180 = vector.broadcast %179 : f32 to vector<8x1024xf32>
    %181 = arith.mulf %180, %178 : vector<8x1024xf32>
    %182 = arith.addf %164, %181 : vector<8x1024xf32>
    %c0_21 = arith.constant 0 : index
    %c0_22 = arith.constant 0 : index
    %183 = vector.load %arg3[%c0_21, %c0_22] : memref<8x1024xf32, #tpu.memory_space<vmem>>, vector<8x1024xf32>
    tpu.vector_store %arg3[%c0_21, %c0_22], %182 {strides = array<i32>} : memref<8x1024xf32, #tpu.memory_space<vmem>>, vector<8x1024xf32>,
    return
  }
  func.func @transform_0(%arg0: i32) -> (i32, i32) {
    %c0_i32 = arith.constant 0 : i32
    %c0_i32_0 = arith.constant 0 : i32
    return %arg0, %c0_i32 : i32, i32
  }
  func.func @transform_1(%arg0: i32) -> i32 {
    %c0_i32 = arith.constant 0 : i32
    %c0_i32_0 = arith.constant 0 : i32
    return %c0_i32 : i32
  }
  func.func @transform_2(%arg0: i32) -> (i32, i32) {
    %c0_i32 = arith.constant 0 : i32
    %c0_i32_0 = arith.constant 0 : i32
    return %arg0, %c0_i32 : i32, i32
  }
}

</mosaic_0001>

<llo_original>
// kernel: tpu_custom_call.1
$region0: #{tpu_custom_call.1}
  #allocation0 [shape = 'u32[]', space=smem, size = 0x4, offset = 0x4, fixed_abs, tag = 'smem constant byte address 0x4 - core index']
  #allocation1 [shape = 'u32[144,128]{1,0:T(1,128)}', space=vmem, size = 0x12000, scoped, tag = 'internal scratch']
  %s0 = inlined_call_operand.hbm [shape: f32[8,1024], index: 0, kind: input, shape index: {}]
  %s1 = inlined_call_operand.vmem [shape: f32[31], index: 1, kind: input, shape index: {}]
  %s2 = inlined_call_operand.hbm [shape: f32[8,1024], index: 2, kind: output, shape index: {}]
  %s3 = sld [smem:[#allocation0]]
  $region26: #{tpu_custom_call.1} parent=0
    _
  %s5 = ssub.s32 1, %s3
  %s6 = scalar_select 0, %s5, %s3
  $region1: #{tpu_custom_call.1} parent=0
    #allocation2 [shape = 'u8[32768]{0}', space=vmem, size = 0x8000, scoped, tag = 'input window, operand 0, single buffered']
    #allocation3 [shape = 's32[1]{0}', space=sflag, size = 0x4, scoped, tag = 'scoped memory for tpu_custom_call.1']
    #allocation4 [shape = 's32[1]{0}', space=sflag, size = 0x4, scoped, tag = 'scoped memory for tpu_custom_call.1']
    #allocation5 [shape = 's32[1]{0}', space=sflag, size = 0x4, scoped, tag = 'scoped memory for tpu_custom_call.1']
    #allocation6 [shape = 'u8[512]{0}', space=smem, size = 0x200, scoped, tag = 'input window, operand 1, single buffered']
    #allocation7 [shape = 'u8[32768]{0}', space=vmem, size = 0x8000, scoped, tag = 'output window, operand 0, single buffered']
    %7 = vsyncpa [#allocation3], 0
    %8 = vsyncpa [#allocation5], 0
    %9 = vsyncpa [#allocation4], 0
    // Predicated region
    $region2: #{tpu_custom_call.1} parent=1 // pred_check
      _
    $region3: #{tpu_custom_call.1} parent=1 // pred_check_branch
      %11 = sbr.rel (0) target = $region5
    $region4: #{tpu_custom_call.1} parent=1 // pred_region
      %s13 = ssub.s32 1024, 1024
      %14 = vsyncadd [#allocation3], %s13
      %s16 = sshll.u32 [#allocation2], 4
      %s17 = int_to_ptr.vmem [resolvable:$true] %s16
      %19 = dma.hbm_to_vmem [thread:$0]  %s0, 1024, %s17, [#allocation3]
    $region5: #{tpu_custom_call.1} parent=1 // pred_fallthru
      _
    // Predicated region
    $region6: #{tpu_custom_call.1} parent=1 // pred_check
      _
    $region7: #{tpu_custom_call.1} parent=1 // pred_check_branch
      %21 = sbr.rel (0) target = $region9
    $region8: #{tpu_custom_call.1} parent=1 // pred_region
      %s23 = ssub.s32 16, 16
      %24 = vsyncadd [#allocation5], %s23
      %s26 = sshll.u32 %s1, 4
      %s27 = int_to_ptr.vmem [resolvable:$true] %s26
      %29 = dma.vmem_to_smem %s27, 16, [#allocation6], [#allocation5]
    $region9: #{tpu_custom_call.1} parent=1 // pred_fallthru
      _
    // Predicated region
    $region10: #{tpu_custom_call.1} parent=1 // pred_check
      _
    $region11: #{tpu_custom_call.1} parent=1 // pred_check_branch
      %31 = sbr.rel (0) target = $region13
    $region12: #{tpu_custom_call.1} parent=1 // pred_region
      %32 = dma.done [#allocation3], 1024
    $region13: #{tpu_custom_call.1} parent=1 // pred_fallthru
      _
    // Predicated region
    $region14: #{tpu_custom_call.1} parent=1 // pred_check
      _
    $region15: #{tpu_custom_call.1} parent=1 // pred_check_branch
      %34 = sbr.rel (0) target = $region17
    $region16: #{tpu_custom_call.1} parent=1 // pred_region
      %35 = dma.done [#allocation5], 16
    $region17: #{tpu_custom_call.1} parent=1 // pred_fallthru
      _
    %36 = sfence
    %v37 = vld [vmem:[#allocation2] sm:$0xff]
    %v38 = vld [vmem:[#allocation2 + $0x8] sm:$0xff]
    %v39 = vld [vmem:[#allocation2 + $0x10] sm:$0xff]
    %v40 = vld [vmem:[#allocation2 + $0x18] sm:$0xff]
    %v41 = vld [vmem:[#allocation2 + $0x20] sm:$0xff]
    %v42 = vld [vmem:[#allocation2 + $0x28] sm:$0xff]
    %v43 = vld [vmem:[#allocation2 + $0x30] sm:$0xff]
    %v44 = vld [vmem:[#allocation2 + $0x38] sm:$0xff]
    %s45 = sld [smem:[#allocation6 + $0x1e]]
    %v46 = vstv %s45
    %s47 = sld [smem:[#allocation6]]
    %v48 = vstv %s47
    %v49 = vmul.f32 %v48, %v37
    %v50 = vmul.f32 %v48, %v38
    %v51 = vmul.f32 %v48, %v39
    %v52 = vmul.f32 %v48, %v40
    %v53 = vmul.f32 %v48, %v41
    %v54 = vmul.f32 %v48, %v42
    %v55 = vmul.f32 %v48, %v43
    %v56 = vmul.f32 %v48, %v44
    %s57 = sld [smem:[#allocation6 + $0xa]]
    %v58 = vstv %s57
    %v59 = vadd.f32 %v49, %v58
    %v60 = vadd.f32 %v50, %v58
    %v61 = vadd.f32 %v51, %v58
    %v62 = vadd.f32 %v52, %v58
    %v63 = vadd.f32 %v53, %v58
    %v64 = vadd.f32 %v54, %v58
    %v65 = vadd.f32 %v55, %v58
    %v66 = vadd.f32 %v56, %v58
    %v67 = vmax.f32 %v59, 0.0
    %v68 = vmax.f32 %v60, 0.0
    %v69 = vmax.f32 %v61, 0.0
    %v70 = vmax.f32 %v62, 0.0
    %v71 = vmax.f32 %v63, 0.0
    %v72 = vmax.f32 %v64, 0.0
    %v73 = vmax.f32 %v65, 0.0
    %v74 = vmax.f32 %v66, 0.0
    %v75 = vand.u32 2147483647, %v59
    %v76 = vand.u32 2147483647, %v60
    %v77 = vand.u32 2147483647, %v61
    %v78 = vand.u32 2147483647, %v62
    %v79 = vand.u32 2147483647, %v63
    %v80 = vand.u32 2147483647, %v64
    %v81 = vand.u32 2147483647, %v65
    %v82 = vand.u32 2147483647, %v66
    %v83 = vsub.f32 0.0, %v75
    %v84 = vsub.f32 0.0, %v76
    %v85 = vsub.f32 0.0, %v77
    %v86 = vsub.f32 0.0, %v78
    %v87 = vsub.f32 0.0, %v79
    %v88 = vsub.f32 0.0, %v80
    %v89 = vsub.f32 0.0, %v81
    %v90 = vsub.f32 0.0, %v82
    %v91 = vmul.f32 %v83, 1.442695
    %v92 = vpow.pop %v91
    %v93 = vmul.f32 %v84, 1.442695
    %v94 = vpow.pop %v93
    %v95 = vmul.f32 %v85, 1.442695
    %v96 = vpow.pop %v95
    %v97 = vmul.f32 %v86, 1.442695
    %v98 = vpow.pop %v97
    %v99 = vmul.f32 %v87, 1.442695
    %v100 = vpow.pop %v99
    %v101 = vmul.f32 %v88, 1.442695
    %v102 = vpow.pop %v101
    %v103 = vmul.f32 %v89, 1.442695
    %v104 = vpow.pop %v103
    %v105 = vmul.f32 %v90, 1.442695
    %v106 = vpow.pop %v105
    %v107 = vadd.f32 %v92, 1.0
    %v108 = vlog2.pop %v107
    %v109 = vmul.f32 %v108, 0.6931472
    %v110 = vmul.f32 -0.5, %v92
    %v111 = vadd.f32 %v110, 1.0
    %v112 = vmul.f32 %v111, %v92
    %v113 = vand.u32 2147483647, %v92
    %vm114 = vcmp.lt.f32.partialorder %v113, 0.0004427343
    %v115 = vsel %vm114, %v112, %v109
    %v116 = vadd.f32 %v94, 1.0
    %v117 = vlog2.pop %v116
    %v118 = vmul.f32 %v117, 0.6931472
    %v119 = vmul.f32 -0.5, %v94
    %v120 = vadd.f32 %v119, 1.0
    %v121 = vmul.f32 %v120, %v94
    %v122 = vand.u32 2147483647, %v94
    %vm123 = vcmp.lt.f32.partialorder %v122, 0.0004427343
    %v124 = vsel %vm123, %v121, %v118
    %v125 = vadd.f32 %v96, 1.0
    %v126 = vlog2.pop %v125
    %v127 = vmul.f32 %v126, 0.6931472
    %v128 = vmul.f32 -0.5, %v96
    %v129 = vadd.f32 %v128, 1.0
    %v130 = vmul.f32 %v129, %v96
    %v131 = vand.u32 2147483647, %v96
    %vm132 = vcmp.lt.f32.partialorder %v131, 0.0004427343
    %v133 = vsel %vm132, %v130, %v127
    %v134 = vadd.f32 %v98, 1.0
    %v135 = vlog2.pop %v134
    %v136 = vmul.f32 %v135, 0.6931472
    %v137 = vmul.f32 -0.5, %v98
    %v138 = vadd.f32 %v137, 1.0
    %v139 = vmul.f32 %v138, %v98
    %v140 = vand.u32 2147483647, %v98
    %vm141 = vcmp.lt.f32.partialorder %v140, 0.0004427343
    %v142 = vsel %vm141, %v139, %v136
    %v143 = vadd.f32 %v100, 1.0
    %v144 = vlog2.pop %v143
    %v145 = vmul.f32 %v144, 0.6931472
    %v146 = vmul.f32 -0.5, %v100
    %v147 = vadd.f32 %v146, 1.0
    %v148 = vmul.f32 %v147, %v100
    %v149 = vand.u32 2147483647, %v100
    %vm150 = vcmp.lt.f32.partialorder %v149, 0.0004427343
    %v151 = vsel %vm150, %v148, %v145
    %v152 = vadd.f32 %v102, 1.0
    %v153 = vlog2.pop %v152
    %v154 = vmul.f32 %v153, 0.6931472
    %v155 = vmul.f32 -0.5, %v102
    %v156 = vadd.f32 %v155, 1.0
    %v157 = vmul.f32 %v156, %v102
    %v158 = vand.u32 2147483647, %v102
    %vm159 = vcmp.lt.f32.partialorder %v158, 0.0004427343
    %v160 = vsel %vm159, %v157, %v154
    %v161 = vadd.f32 %v104, 1.0
    %v162 = vlog2.pop %v161
    %v163 = vmul.f32 %v162, 0.6931472
    %v164 = vmul.f32 -0.5, %v104
    %v165 = vadd.f32 %v164, 1.0
    %v166 = vmul.f32 %v165, %v104
    %v167 = vand.u32 2147483647, %v104
    %vm168 = vcmp.lt.f32.partialorder %v167, 0.0004427343
    %v169 = vsel %vm168, %v166, %v163
    %v170 = vadd.f32 %v106, 1.0
    %v171 = vlog2.pop %v170
    %v172 = vmul.f32 %v171, 0.6931472
    %v173 = vmul.f32 -0.5, %v106
    %v174 = vadd.f32 %v173, 1.0
    %v175 = vmul.f32 %v174, %v106
    %v176 = vand.u32 2147483647, %v106
    %vm177 = vcmp.lt.f32.partialorder %v176, 0.0004427343
    %v178 = vsel %vm177, %v175, %v172
    %v179 = vadd.f32 %v67, %v115
    %v180 = vadd.f32 %v68, %v124
    %v181 = vadd.f32 %v69, %v133
    %v182 = vadd.f32 %v70, %v142
    %v183 = vadd.f32 %v71, %v151
    %v184 = vadd.f32 %v72, %v160
    %v185 = vadd.f32 %v73, %v169
    %v186 = vadd.f32 %v74, %v178
    %s187 = sld [smem:[#allocation6 + $0x14]]
    %v188 = vstv %s187
    %v189 = vmul.f32 %v188, %v179
    %v190 = vmul.f32 %v188, %v180
    %v191 = vmul.f32 %v188, %v181
    %v192 = vmul.f32 %v188, %v182
    %v193 = vmul.f32 %v188, %v183
    %v194 = vmul.f32 %v188, %v184
    %v195 = vmul.f32 %v188, %v185
    %v196 = vmul.f32 %v188, %v186
    %v197 = vadd.f32 %v46, %v189
    %v198 = vadd.f32 %v46, %v190
    %v199 = vadd.f32 %v46, %v191
    %v200 = vadd.f32 %v46, %v192
    %v201 = vadd.f32 %v46, %v193
    %v202 = vadd.f32 %v46, %v194
    %v203 = vadd.f32 %v46, %v195
    %v204 = vadd.f32 %v46, %v196
    %s205 = sld [smem:[#allocation6 + $0x1]]
    %v206 = vstv %s205
    %v207 = vmul.f32 %v206, %v37
    %v208 = vmul.f32 %v206, %v38
    %v209 = vmul.f32 %v206, %v39
    %v210 = vmul.f32 %v206, %v40
    %v211 = vmul.f32 %v206, %v41
    %v212 = vmul.f32 %v206, %v42
    %v213 = vmul.f32 %v206, %v43
    %v214 = vmul.f32 %v206, %v44
    %s215 = sld [smem:[#allocation6 + $0xb]]
    %v216 = vstv %s215
    %v217 = vadd.f32 %v207, %v216
    %v218 = vadd.f32 %v208, %v216
    %v219 = vadd.f32 %v209, %v216
    %v220 = vadd.f32 %v210, %v216
    %v221 = vadd.f32 %v211, %v216
    %v222 = vadd.f32 %v212, %v216
    %v223 = vadd.f32 %v213, %v216
    %v224 = vadd.f32 %v214, %v216
    %v225 = vmax.f32 %v217, 0.0
    %v226 = vmax.f32 %v218, 0.0
    %v227 = vmax.f32 %v219, 0.0
    %v228 = vmax.f32 %v220, 0.0
    %v229 = vmax.f32 %v221, 0.0
    %v230 = vmax.f32 %v222, 0.0
    %v231 = vmax.f32 %v223, 0.0
    %v232 = vmax.f32 %v224, 0.0
    %v233 = vand.u32 2147483647, %v217
    %v234 = vand.u32 2147483647, %v218
    %v235 = vand.u32 2147483647, %v219
    %v236 = vand.u32 2147483647, %v220
    %v237 = vand.u32 2147483647, %v221
    %v238 = vand.u32 2147483647, %v222
    %v239 = vand.u32 2147483647, %v223
    %v240 = vand.u32 2147483647, %v224
    %v241 = vsub.f32 0.0, %v233
    %v242 = vsub.f32 0.0, %v234
    %v243 = vsub.f32 0.0, %v235
    %v244 = vsub.f32 0.0, %v236
    %v245 = vsub.f32 0.0, %v237
    %v246 = vsub.f32 0.0, %v238
    %v247 = vsub.f32 0.0, %v239
    %v248 = vsub.f32 0.0, %v240
    %v249 = vmul.f32 %v241, 1.442695
    %v250 = vpow.pop %v249
    %v251 = vmul.f32 %v242, 1.442695
    %v252 = vpow.pop %v251
    %v253 = vmul.f32 %v243, 1.442695
    %v254 = vpow.pop %v253
    %v255 = vmul.f32 %v244, 1.442695
    %v256 = vpow.pop %v255
    %v257 = vmul.f32 %v245, 1.442695
    %v258 = vpow.pop %v257
    %v259 = vmul.f32 %v246, 1.442695
    %v260 = vpow.pop %v259
    %v261 = vmul.f32 %v247, 1.442695
    %v262 = vpow.pop %v261
    %v263 = vmul.f32 %v248, 1.442695
    %v264 = vpow.pop %v263
    %v265 = vadd.f32 %v250, 1.0
    %v266 = vlog2.pop %v265
    %v267 = vmul.f32 %v266, 0.6931472
    %v268 = vmul.f32 -0.5, %v250
    %v269 = vadd.f32 %v268, 1.0
    %v270 = vmul.f32 %v269, %v250
    %v271 = vand.u32 2147483647, %v250
    %vm272 = vcmp.lt.f32.partialorder %v271, 0.0004427343
    %v273 = vsel %vm272, %v270, %v267
    %v274 = vadd.f32 %v252, 1.0
    %v275 = vlog2.pop %v274
    %v276 = vmul.f32 %v275, 0.6931472
    %v277 = vmul.f32 -0.5, %v252
    %v278 = vadd.f32 %v277, 1.0
    %v279 = vmul.f32 %v278, %v252
    %v280 = vand.u32 2147483647, %v252
    %vm281 = vcmp.lt.f32.partialorder %v280, 0.0004427343
    %v282 = vsel %vm281, %v279, %v276
    %v283 = vadd.f32 %v254, 1.0
    %v284 = vlog2.pop %v283
    %v285 = vmul.f32 %v284, 0.6931472
    %v286 = vmul.f32 -0.5, %v254
    %v287 = vadd.f32 %v286, 1.0
    %v288 = vmul.f32 %v287, %v254
    %v289 = vand.u32 2147483647, %v254
    %vm290 = vcmp.lt.f32.partialorder %v289, 0.0004427343
    %v291 = vsel %vm290, %v288, %v285
    %v292 = vadd.f32 %v256, 1.0
    %v293 = vlog2.pop %v292
    %v294 = vmul.f32 %v293, 0.6931472
    %v295 = vmul.f32 -0.5, %v256
    %v296 = vadd.f32 %v295, 1.0
    %v297 = vmul.f32 %v296, %v256
    %v298 = vand.u32 2147483647, %v256
    %vm299 = vcmp.lt.f32.partialorder %v298, 0.0004427343
    %v300 = vsel %vm299, %v297, %v294
    %v301 = vadd.f32 %v258, 1.0
    %v302 = vlog2.pop %v301
    %v303 = vmul.f32 %v302, 0.6931472
    %v304 = vmul.f32 -0.5, %v258
    %v305 = vadd.f32 %v304, 1.0
    %v306 = vmul.f32 %v305, %v258
    %v307 = vand.u32 2147483647, %v258
    %vm308 = vcmp.lt.f32.partialorder %v307, 0.0004427343
    %v309 = vsel %vm308, %v306, %v303
    %v310 = vadd.f32 %v260, 1.0
    %v311 = vlog2.pop %v310
    %v312 = vmul.f32 %v311, 0.6931472
    %v313 = vmul.f32 -0.5, %v260
    %v314 = vadd.f32 %v313, 1.0
    %v315 = vmul.f32 %v314, %v260
    %v316 = vand.u32 2147483647, %v260
    %vm317 = vcmp.lt.f32.partialorder %v316, 0.0004427343
    %v318 = vsel %vm317, %v315, %v312
    %v319 = vadd.f32 %v262, 1.0
    %v320 = vlog2.pop %v319
    %v321 = vmul.f32 %v320, 0.6931472
    %v322 = vmul.f32 -0.5, %v262
    %v323 = vadd.f32 %v322, 1.0
    %v324 = vmul.f32 %v323, %v262
    %v325 = vand.u32 2147483647, %v262
    %vm326 = vcmp.lt.f32.partialorder %v325, 0.0004427343
    %v327 = vsel %vm326, %v324, %v321
    %v328 = vadd.f32 %v264, 1.0
    %v329 = vlog2.pop %v328
    %v330 = vmul.f32 %v329, 0.6931472
    %v331 = vmul.f32 -0.5, %v264
    %v332 = vadd.f32 %v331, 1.0
    %v333 = vmul.f32 %v332, %v264
    %v334 = vand.u32 2147483647, %v264
    %vm335 = vcmp.lt.f32.partialorder %v334, 0.0004427343
    %v336 = vsel %vm335, %v333, %v330
    %v337 = vadd.f32 %v225, %v273
    %v338 = vadd.f32 %v226, %v282
    %v339 = vadd.f32 %v227, %v291
    %v340 = vadd.f32 %v228, %v300
    %v341 = vadd.f32 %v229, %v309
    %v342 = vadd.f32 %v230, %v318
    %v343 = vadd.f32 %v231, %v327
    %v344 = vadd.f32 %v232, %v336
    %s345 = sld [smem:[#allocation6 + $0x15]]
    %v346 = vstv %s345
    %v347 = vmul.f32 %v346, %v337
    %v348 = vmul.f32 %v346, %v338
    %v349 = vmul.f32 %v346, %v339
    %v350 = vmul.f32 %v346, %v340
    %v351 = vmul.f32 %v346, %v341
    %v352 = vmul.f32 %v346, %v342
    %v353 = vmul.f32 %v346, %v343
    %v354 = vmul.f32 %v346, %v344
    %v355 = vadd.f32 %v197, %v347
    %v356 = vadd.f32 %v198, %v348
    %v357 = vadd.f32 %v199, %v349
    %v358 = vadd.f32 %v200, %v350
    %v359 = vadd.f32 %v201, %v351
    %v360 = vadd.f32 %v202, %v352
    %v361 = vadd.f32 %v203, %v353
    %v362 = vadd.f32 %v204, %v354
    %s363 = sld [smem:[#allocation6 + $0x2]]
    %v364 = vstv %s363
    %v365 = vmul.f32 %v364, %v37
    %v366 = vmul.f32 %v364, %v38
    %v367 = vmul.f32 %v364, %v39
    %v368 = vmul.f32 %v364, %v40
    %v369 = vmul.f32 %v364, %v41
    %v370 = vmul.f32 %v364, %v42
    %v371 = vmul.f32 %v364, %v43
    %v372 = vmul.f32 %v364, %v44
    %s373 = sld [smem:[#allocation6 + $0xc]]
    %v374 = vstv %s373
    %v375 = vadd.f32 %v365, %v374
    %v376 = vadd.f32 %v366, %v374
    %v377 = vadd.f32 %v367, %v374
    %v378 = vadd.f32 %v368, %v374
    %v379 = vadd.f32 %v369, %v374
    %v380 = vadd.f32 %v370, %v374
    %v381 = vadd.f32 %v371, %v374
    %v382 = vadd.f32 %v372, %v374
    %v383 = vmax.f32 %v375, 0.0
    %v384 = vmax.f32 %v376, 0.0
    %v385 = vmax.f32 %v377, 0.0
    %v386 = vmax.f32 %v378, 0.0
    %v387 = vmax.f32 %v379, 0.0
    %v388 = vmax.f32 %v380, 0.0
    %v389 = vmax.f32 %v381, 0.0
    %v390 = vmax.f32 %v382, 0.0
    %v391 = vand.u32 2147483647, %v375
    %v392 = vand.u32 2147483647, %v376
    %v393 = vand.u32 2147483647, %v377
    %v394 = vand.u32 2147483647, %v378
    %v395 = vand.u32 2147483647, %v379
    %v396 = vand.u32 2147483647, %v380
    %v397 = vand.u32 2147483647, %v381
    %v398 = vand.u32 2147483647, %v382
    %v399 = vsub.f32 0.0, %v391
    %v400 = vsub.f32 0.0, %v392
    %v401 = vsub.f32 0.0, %v393
    %v402 = vsub.f32 0.0, %v394
    %v403 = vsub.f32 0.0, %v395
    %v404 = vsub.f32 0.0, %v396
    %v405 = vsub.f32 0.0, %v397
    %v406 = vsub.f32 0.0, %v398
    %v407 = vmul.f32 %v399, 1.442695
    %v408 = vpow.pop %v407
    %v409 = vmul.f32 %v400, 1.442695
    %v410 = vpow.pop %v409
    %v411 = vmul.f32 %v401, 1.442695
    %v412 = vpow.pop %v411
    %v413 = vmul.f32 %v402, 1.442695
    %v414 = vpow.pop %v413
    %v415 = vmul.f32 %v403, 1.442695
    %v416 = vpow.pop %v415
    %v417 = vmul.f32 %v404, 1.442695
    %v418 = vpow.pop %v417
    %v419 = vmul.f32 %v405, 1.442695
    %v420 = vpow.pop %v419
    %v421 = vmul.f32 %v406, 1.442695
    %v422 = vpow.pop %v421
    %v423 = vadd.f32 %v408, 1.0
    %v424 = vlog2.pop %v423
    %v425 = vmul.f32 %v424, 0.6931472
    %v426 = vmul.f32 -0.5, %v408
    %v427 = vadd.f32 %v426, 1.0
    %v428 = vmul.f32 %v427, %v408
    %v429 = vand.u32 2147483647, %v408
    %vm430 = vcmp.lt.f32.partialorder %v429, 0.0004427343
    %v431 = vsel %vm430, %v428, %v425
    %v432 = vadd.f32 %v410, 1.0
    %v433 = vlog2.pop %v432
    %v434 = vmul.f32 %v433, 0.6931472
    %v435 = vmul.f32 -0.5, %v410
    %v436 = vadd.f32 %v435, 1.0
    %v437 = vmul.f32 %v436, %v410
    %v438 = vand.u32 2147483647, %v410
    %vm439 = vcmp.lt.f32.partialorder %v438, 0.0004427343
    %v440 = vsel %vm439, %v437, %v434
    %v441 = vadd.f32 %v412, 1.0
    %v442 = vlog2.pop %v441
    %v443 = vmul.f32 %v442, 0.6931472
    %v444 = vmul.f32 -0.5, %v412
    %v445 = vadd.f32 %v444, 1.0
    %v446 = vmul.f32 %v445, %v412
    %v447 = vand.u32 2147483647, %v412
    %vm448 = vcmp.lt.f32.partialorder %v447, 0.0004427343
    %v449 = vsel %vm448, %v446, %v443
    %v450 = vadd.f32 %v414, 1.0
    %v451 = vlog2.pop %v450
    %v452 = vmul.f32 %v451, 0.6931472
    %v453 = vmul.f32 -0.5, %v414
    %v454 = vadd.f32 %v453, 1.0
    %v455 = vmul.f32 %v454, %v414
    %v456 = vand.u32 2147483647, %v414
    %vm457 = vcmp.lt.f32.partialorder %v456, 0.0004427343
    %v458 = vsel %vm457, %v455, %v452
    %v459 = vadd.f32 %v416, 1.0
    %v460 = vlog2.pop %v459
    %v461 = vmul.f32 %v460, 0.6931472
    %v462 = vmul.f32 -0.5, %v416
    %v463 = vadd.f32 %v462, 1.0
    %v464 = vmul.f32 %v463, %v416
    %v465 = vand.u32 2147483647, %v416
    %vm466 = vcmp.lt.f32.partialorder %v465, 0.0004427343
    %v467 = vsel %vm466, %v464, %v461
    %v468 = vadd.f32 %v418, 1.0
    %v469 = vlog2.pop %v468
    %v470 = vmul.f32 %v469, 0.6931472
    %v471 = vmul.f32 -0.5, %v418
    %v472 = vadd.f32 %v471, 1.0
    %v473 = vmul.f32 %v472, %v418
    %v474 = vand.u32 2147483647, %v418
    %vm475 = vcmp.lt.f32.partialorder %v474, 0.0004427343
    %v476 = vsel %vm475, %v473, %v470
    %v477 = vadd.f32 %v420, 1.0
    %v478 = vlog2.pop %v477
    %v479 = vmul.f32 %v478, 0.6931472
    %v480 = vmul.f32 -0.5, %v420
    %v481 = vadd.f32 %v480, 1.0
    %v482 = vmul.f32 %v481, %v420
    %v483 = vand.u32 2147483647, %v420
    %vm484 = vcmp.lt.f32.partialorder %v483, 0.0004427343
    %v485 = vsel %vm484, %v482, %v479
    %v486 = vadd.f32 %v422, 1.0
    %v487 = vlog2.pop %v486
    %v488 = vmul.f32 %v487, 0.6931472
    %v489 = vmul.f32 -0.5, %v422
    %v490 = vadd.f32 %v489, 1.0
    %v491 = vmul.f32 %v490, %v422
    %v492 = vand.u32 2147483647, %v422
    %vm493 = vcmp.lt.f32.partialorder %v492, 0.0004427343
    %v494 = vsel %vm493, %v491, %v488
    %v495 = vadd.f32 %v383, %v431
    %v496 = vadd.f32 %v384, %v440
    %v497 = vadd.f32 %v385, %v449
    %v498 = vadd.f32 %v386, %v458
    %v499 = vadd.f32 %v387, %v467
    %v500 = vadd.f32 %v388, %v476
    %v501 = vadd.f32 %v389, %v485
    %v502 = vadd.f32 %v390, %v494
    %s503 = sld [smem:[#allocation6 + $0x16]]
    %v504 = vstv %s503
    %v505 = vmul.f32 %v504, %v495
    %v506 = vmul.f32 %v504, %v496
    %v507 = vmul.f32 %v504, %v497
    %v508 = vmul.f32 %v504, %v498
    %v509 = vmul.f32 %v504, %v499
    %v510 = vmul.f32 %v504, %v500
    %v511 = vmul.f32 %v504, %v501
    %v512 = vmul.f32 %v504, %v502
    %v513 = vadd.f32 %v355, %v505
    %v514 = vadd.f32 %v356, %v506
    %v515 = vadd.f32 %v357, %v507
    %v516 = vadd.f32 %v358, %v508
    %v517 = vadd.f32 %v359, %v509
    %v518 = vadd.f32 %v360, %v510
    %v519 = vadd.f32 %v361, %v511
    %v520 = vadd.f32 %v362, %v512
    %s521 = sld [smem:[#allocation6 + $0x3]]
    %v522 = vstv %s521
    %v523 = vmul.f32 %v522, %v37
    %v524 = vmul.f32 %v522, %v38
    %v525 = vmul.f32 %v522, %v39
    %v526 = vmul.f32 %v522, %v40
    %v527 = vmul.f32 %v522, %v41
    %v528 = vmul.f32 %v522, %v42
    %v529 = vmul.f32 %v522, %v43
    %v530 = vmul.f32 %v522, %v44
    %s531 = sld [smem:[#allocation6 + $0xd]]
    %v532 = vstv %s531
    %v533 = vadd.f32 %v523, %v532
    %v534 = vadd.f32 %v524, %v532
    %v535 = vadd.f32 %v525, %v532
    %v536 = vadd.f32 %v526, %v532
    %v537 = vadd.f32 %v527, %v532
    %v538 = vadd.f32 %v528, %v532
    %v539 = vadd.f32 %v529, %v532
    %v540 = vadd.f32 %v530, %v532
    %v541 = vmax.f32 %v533, 0.0
    %v542 = vmax.f32 %v534, 0.0
    %v543 = vmax.f32 %v535, 0.0
    %v544 = vmax.f32 %v536, 0.0
    %v545 = vmax.f32 %v537, 0.0
    %v546 = vmax.f32 %v538, 0.0
    %v547 = vmax.f32 %v539, 0.0
    %v548 = vmax.f32 %v540, 0.0
    %v549 = vand.u32 2147483647, %v533
    %v550 = vand.u32 2147483647, %v534
    %v551 = vand.u32 2147483647, %v535
    %v552 = vand.u32 2147483647, %v536
    %v553 = vand.u32 2147483647, %v537
    %v554 = vand.u32 2147483647, %v538
    %v555 = vand.u32 2147483647, %v539
    %v556 = vand.u32 2147483647, %v540
    %v557 = vsub.f32 0.0, %v549
    %v558 = vsub.f32 0.0, %v550
    %v559 = vsub.f32 0.0, %v551
    %v560 = vsub.f32 0.0, %v552
    %v561 = vsub.f32 0.0, %v553
    %v562 = vsub.f32 0.0, %v554
    %v563 = vsub.f32 0.0, %v555
    %v564 = vsub.f32 0.0, %v556
    %v565 = vmul.f32 %v557, 1.442695
    %v566 = vpow.pop %v565
    %v567 = vmul.f32 %v558, 1.442695
    %v568 = vpow.pop %v567
    %v569 = vmul.f32 %v559, 1.442695
    %v570 = vpow.pop %v569
    %v571 = vmul.f32 %v560, 1.442695
    %v572 = vpow.pop %v571
    %v573 = vmul.f32 %v561, 1.442695
    %v574 = vpow.pop %v573
    %v575 = vmul.f32 %v562, 1.442695
    %v576 = vpow.pop %v575
    %v577 = vmul.f32 %v563, 1.442695
    %v578 = vpow.pop %v577
    %v579 = vmul.f32 %v564, 1.442695
    %v580 = vpow.pop %v579
    %v581 = vadd.f32 %v566, 1.0
    %v582 = vlog2.pop %v581
    %v583 = vmul.f32 %v582, 0.6931472
    %v584 = vmul.f32 -0.5, %v566
    %v585 = vadd.f32 %v584, 1.0
    %v586 = vmul.f32 %v585, %v566
    %v587 = vand.u32 2147483647, %v566
    %vm588 = vcmp.lt.f32.partialorder %v587, 0.0004427343
    %v589 = vsel %vm588, %v586, %v583
    %v590 = vadd.f32 %v568, 1.0
    %v591 = vlog2.pop %v590
    %v592 = vmul.f32 %v591, 0.6931472
    %v593 = vmul.f32 -0.5, %v568
    %v594 = vadd.f32 %v593, 1.0
    %v595 = vmul.f32 %v594, %v568
    %v596 = vand.u32 2147483647, %v568
    %vm597 = vcmp.lt.f32.partialorder %v596, 0.0004427343
    %v598 = vsel %vm597, %v595, %v592
    %v599 = vadd.f32 %v570, 1.0
    %v600 = vlog2.pop %v599
    %v601 = vmul.f32 %v600, 0.6931472
    %v602 = vmul.f32 -0.5, %v570
    %v603 = vadd.f32 %v602, 1.0
    %v604 = vmul.f32 %v603, %v570
    %v605 = vand.u32 2147483647, %v570
    %vm606 = vcmp.lt.f32.partialorder %v605, 0.0004427343
    %v607 = vsel %vm606, %v604, %v601
    %v608 = vadd.f32 %v572, 1.0
    %v609 = vlog2.pop %v608
    %v610 = vmul.f32 %v609, 0.6931472
    %v611 = vmul.f32 -0.5, %v572
    %v612 = vadd.f32 %v611, 1.0
    %v613 = vmul.f32 %v612, %v572
    %v614 = vand.u32 2147483647, %v572
    %vm615 = vcmp.lt.f32.partialorder %v614, 0.0004427343
    %v616 = vsel %vm615, %v613, %v610
    %v617 = vadd.f32 %v574, 1.0
    %v618 = vlog2.pop %v617
    %v619 = vmul.f32 %v618, 0.6931472
    %v620 = vmul.f32 -0.5, %v574
    %v621 = vadd.f32 %v620, 1.0
    %v622 = vmul.f32 %v621, %v574
    %v623 = vand.u32 2147483647, %v574
    %vm624 = vcmp.lt.f32.partialorder %v623, 0.0004427343
    %v625 = vsel %vm624, %v622, %v619
    %v626 = vadd.f32 %v576, 1.0
    %v627 = vlog2.pop %v626
    %v628 = vmul.f32 %v627, 0.6931472
    %v629 = vmul.f32 -0.5, %v576
    %v630 = vadd.f32 %v629, 1.0
    %v631 = vmul.f32 %v630, %v576
    %v632 = vand.u32 2147483647, %v576
    %vm633 = vcmp.lt.f32.partialorder %v632, 0.0004427343
    %v634 = vsel %vm633, %v631, %v628
    %v635 = vadd.f32 %v578, 1.0
    %v636 = vlog2.pop %v635
    %v637 = vmul.f32 %v636, 0.6931472
    %v638 = vmul.f32 -0.5, %v578
    %v639 = vadd.f32 %v638, 1.0
    %v640 = vmul.f32 %v639, %v578
    %v641 = vand.u32 2147483647, %v578
    %vm642 = vcmp.lt.f32.partialorder %v641, 0.0004427343
    %v643 = vsel %vm642, %v640, %v637
    %v644 = vadd.f32 %v580, 1.0
    %v645 = vlog2.pop %v644
    %v646 = vmul.f32 %v645, 0.6931472
    %v647 = vmul.f32 -0.5, %v580
    %v648 = vadd.f32 %v647, 1.0
    %v649 = vmul.f32 %v648, %v580
    %v650 = vand.u32 2147483647, %v580
    %vm651 = vcmp.lt.f32.partialorder %v650, 0.0004427343
    %v652 = vsel %vm651, %v649, %v646
    %v653 = vadd.f32 %v541, %v589
    %v654 = vadd.f32 %v542, %v598
    %v655 = vadd.f32 %v543, %v607
    %v656 = vadd.f32 %v544, %v616
    %v657 = vadd.f32 %v545, %v625
    %v658 = vadd.f32 %v546, %v634
    %v659 = vadd.f32 %v547, %v643
    %v660 = vadd.f32 %v548, %v652
    %s661 = sld [smem:[#allocation6 + $0x17]]
    %v662 = vstv %s661
    %v663 = vmul.f32 %v662, %v653
    %v664 = vmul.f32 %v662, %v654
    %v665 = vmul.f32 %v662, %v655
    %v666 = vmul.f32 %v662, %v656
    %v667 = vmul.f32 %v662, %v657
    %v668 = vmul.f32 %v662, %v658
    %v669 = vmul.f32 %v662, %v659
    %v670 = vmul.f32 %v662, %v660
    %v671 = vadd.f32 %v513, %v663
    %v672 = vadd.f32 %v514, %v664
    %v673 = vadd.f32 %v515, %v665
    %v674 = vadd.f32 %v516, %v666
    %v675 = vadd.f32 %v517, %v667
    %v676 = vadd.f32 %v518, %v668
    %v677 = vadd.f32 %v519, %v669
    %v678 = vadd.f32 %v520, %v670
    %s679 = sld [smem:[#allocation6 + $0x4]]
    %v680 = vstv %s679
    %v681 = vmul.f32 %v680, %v37
    %v682 = vmul.f32 %v680, %v38
    %v683 = vmul.f32 %v680, %v39
    %v684 = vmul.f32 %v680, %v40
    %v685 = vmul.f32 %v680, %v41
    %v686 = vmul.f32 %v680, %v42
    %v687 = vmul.f32 %v680, %v43
    %v688 = vmul.f32 %v680, %v44
    %s689 = sld [smem:[#allocation6 + $0xe]]
    %v690 = vstv %s689
    %v691 = vadd.f32 %v681, %v690
    %v692 = vadd.f32 %v682, %v690
    %v693 = vadd.f32 %v683, %v690
    %v694 = vadd.f32 %v684, %v690
    %v695 = vadd.f32 %v685, %v690
    %v696 = vadd.f32 %v686, %v690
    %v697 = vadd.f32 %v687, %v690
    %v698 = vadd.f32 %v688, %v690
    %v699 = vmax.f32 %v691, 0.0
    %v700 = vmax.f32 %v692, 0.0
    %v701 = vmax.f32 %v693, 0.0
    %v702 = vmax.f32 %v694, 0.0
    %v703 = vmax.f32 %v695, 0.0
    %v704 = vmax.f32 %v696, 0.0
    %v705 = vmax.f32 %v697, 0.0
    %v706 = vmax.f32 %v698, 0.0
    %v707 = vand.u32 2147483647, %v691
    %v708 = vand.u32 2147483647, %v692
    %v709 = vand.u32 2147483647, %v693
    %v710 = vand.u32 2147483647, %v694
    %v711 = vand.u32 2147483647, %v695
    %v712 = vand.u32 2147483647, %v696
    %v713 = vand.u32 2147483647, %v697
    %v714 = vand.u32 2147483647, %v698
    %v715 = vsub.f32 0.0, %v707
    %v716 = vsub.f32 0.0, %v708
    %v717 = vsub.f32 0.0, %v709
    %v718 = vsub.f32 0.0, %v710
    %v719 = vsub.f32 0.0, %v711
    %v720 = vsub.f32 0.0, %v712
    %v721 = vsub.f32 0.0, %v713
    %v722 = vsub.f32 0.0, %v714
    %v723 = vmul.f32 %v715, 1.442695
    %v724 = vpow.pop %v723
    %v725 = vmul.f32 %v716, 1.442695
    %v726 = vpow.pop %v725
    %v727 = vmul.f32 %v717, 1.442695
    %v728 = vpow.pop %v727
    %v729 = vmul.f32 %v718, 1.442695
    %v730 = vpow.pop %v729
    %v731 = vmul.f32 %v719, 1.442695
    %v732 = vpow.pop %v731
    %v733 = vmul.f32 %v720, 1.442695
    %v734 = vpow.pop %v733
    %v735 = vmul.f32 %v721, 1.442695
    %v736 = vpow.pop %v735
    %v737 = vmul.f32 %v722, 1.442695
    %v738 = vpow.pop %v737
    %v739 = vadd.f32 %v724, 1.0
    %v740 = vlog2.pop %v739
    %v741 = vmul.f32 %v740, 0.6931472
    %v742 = vmul.f32 -0.5, %v724
    %v743 = vadd.f32 %v742, 1.0
    %v744 = vmul.f32 %v743, %v724
    %v745 = vand.u32 2147483647, %v724
    %vm746 = vcmp.lt.f32.partialorder %v745, 0.0004427343
    %v747 = vsel %vm746, %v744, %v741
    %v748 = vadd.f32 %v726, 1.0
    %v749 = vlog2.pop %v748
    %v750 = vmul.f32 %v749, 0.6931472
    %v751 = vmul.f32 -0.5, %v726
    %v752 = vadd.f32 %v751, 1.0
    %v753 = vmul.f32 %v752, %v726
    %v754 = vand.u32 2147483647, %v726
    %vm755 = vcmp.lt.f32.partialorder %v754, 0.0004427343
    %v756 = vsel %vm755, %v753, %v750
    %v757 = vadd.f32 %v728, 1.0
    %v758 = vlog2.pop %v757
    %v759 = vmul.f32 %v758, 0.6931472
    %v760 = vmul.f32 -0.5, %v728
    %v761 = vadd.f32 %v760, 1.0
    %v762 = vmul.f32 %v761, %v728
    %v763 = vand.u32 2147483647, %v728
    %vm764 = vcmp.lt.f32.partialorder %v763, 0.0004427343
    %v765 = vsel %vm764, %v762, %v759
    %v766 = vadd.f32 %v730, 1.0
    %v767 = vlog2.pop %v766
    %v768 = vmul.f32 %v767, 0.6931472
    %v769 = vmul.f32 -0.5, %v730
    %v770 = vadd.f32 %v769, 1.0
    %v771 = vmul.f32 %v770, %v730
    %v772 = vand.u32 2147483647, %v730
    %vm773 = vcmp.lt.f32.partialorder %v772, 0.0004427343
    %v774 = vsel %vm773, %v771, %v768
    %v775 = vadd.f32 %v732, 1.0
    %v776 = vlog2.pop %v775
    %v777 = vmul.f32 %v776, 0.6931472
    %v778 = vmul.f32 -0.5, %v732
    %v779 = vadd.f32 %v778, 1.0
    %v780 = vmul.f32 %v779, %v732
    %v781 = vand.u32 2147483647, %v732
    %vm782 = vcmp.lt.f32.partialorder %v781, 0.0004427343
    %v783 = vsel %vm782, %v780, %v777
    %v784 = vadd.f32 %v734, 1.0
    %v785 = vlog2.pop %v784
    %v786 = vmul.f32 %v785, 0.6931472
    %v787 = vmul.f32 -0.5, %v734
    %v788 = vadd.f32 %v787, 1.0
    %v789 = vmul.f32 %v788, %v734
    %v790 = vand.u32 2147483647, %v734
    %vm791 = vcmp.lt.f32.partialorder %v790, 0.0004427343
    %v792 = vsel %vm791, %v789, %v786
    %v793 = vadd.f32 %v736, 1.0
    %v794 = vlog2.pop %v793
    %v795 = vmul.f32 %v794, 0.6931472
    %v796 = vmul.f32 -0.5, %v736
    %v797 = vadd.f32 %v796, 1.0
    %v798 = vmul.f32 %v797, %v736
    %v799 = vand.u32 2147483647, %v736
    %vm800 = vcmp.lt.f32.partialorder %v799, 0.0004427343
    %v801 = vsel %vm800, %v798, %v795
    %v802 = vadd.f32 %v738, 1.0
    %v803 = vlog2.pop %v802
    %v804 = vmul.f32 %v803, 0.6931472
    %v805 = vmul.f32 -0.5, %v738
    %v806 = vadd.f32 %v805, 1.0
    %v807 = vmul.f32 %v806, %v738
    %v808 = vand.u32 2147483647, %v738
    %vm809 = vcmp.lt.f32.partialorder %v808, 0.0004427343
    %v810 = vsel %vm809, %v807, %v804
    %v811 = vadd.f32 %v699, %v747
    %v812 = vadd.f32 %v700, %v756
    %v813 = vadd.f32 %v701, %v765
    %v814 = vadd.f32 %v702, %v774
    %v815 = vadd.f32 %v703, %v783
    %v816 = vadd.f32 %v704, %v792
    %v817 = vadd.f32 %v705, %v801
    %v818 = vadd.f32 %v706, %v810
    %s819 = sld [smem:[#allocation6 + $0x18]]
    %v820 = vstv %s819
    %v821 = vmul.f32 %v820, %v811
    %v822 = vmul.f32 %v820, %v812
    %v823 = vmul.f32 %v820, %v813
    %v824 = vmul.f32 %v820, %v814
    %v825 = vmul.f32 %v820, %v815
    %v826 = vmul.f32 %v820, %v816
    %v827 = vmul.f32 %v820, %v817
    %v828 = vmul.f32 %v820, %v818
    %v829 = vadd.f32 %v671, %v821
    %v830 = vadd.f32 %v672, %v822
    %v831 = vadd.f32 %v673, %v823
    %v832 = vadd.f32 %v674, %v824
    %v833 = vadd.f32 %v675, %v825
    %v834 = vadd.f32 %v676, %v826
    %v835 = vadd.f32 %v677, %v827
    %v836 = vadd.f32 %v678, %v828
    %s837 = sld [smem:[#allocation6 + $0x5]]
    %v838 = vstv %s837
    %v839 = vmul.f32 %v838, %v37
    %v840 = vmul.f32 %v838, %v38
    %v841 = vmul.f32 %v838, %v39
    %v842 = vmul.f32 %v838, %v40
    %v843 = vmul.f32 %v838, %v41
    %v844 = vmul.f32 %v838, %v42
    %v845 = vmul.f32 %v838, %v43
    %v846 = vmul.f32 %v838, %v44
    %s847 = sld [smem:[#allocation6 + $0xf]]
    %v848 = vstv %s847
    %v849 = vadd.f32 %v839, %v848
    %v850 = vadd.f32 %v840, %v848
    %v851 = vadd.f32 %v841, %v848
    %v852 = vadd.f32 %v842, %v848
    %v853 = vadd.f32 %v843, %v848
    %v854 = vadd.f32 %v844, %v848
    %v855 = vadd.f32 %v845, %v848
    %v856 = vadd.f32 %v846, %v848
    %v857 = vmax.f32 %v849, 0.0
    %v858 = vmax.f32 %v850, 0.0
    %v859 = vmax.f32 %v851, 0.0
    %v860 = vmax.f32 %v852, 0.0
    %v861 = vmax.f32 %v853, 0.0
    %v862 = vmax.f32 %v854, 0.0
    %v863 = vmax.f32 %v855, 0.0
    %v864 = vmax.f32 %v856, 0.0
    %v865 = vand.u32 2147483647, %v849
    %v866 = vand.u32 2147483647, %v850
    %v867 = vand.u32 2147483647, %v851
    %v868 = vand.u32 2147483647, %v852
    %v869 = vand.u32 2147483647, %v853
    %v870 = vand.u32 2147483647, %v854
    %v871 = vand.u32 2147483647, %v855
    %v872 = vand.u32 2147483647, %v856
    %v873 = vsub.f32 0.0, %v865
    %v874 = vsub.f32 0.0, %v866
    %v875 = vsub.f32 0.0, %v867
    %v876 = vsub.f32 0.0, %v868
    %v877 = vsub.f32 0.0, %v869
    %v878 = vsub.f32 0.0, %v870
    %v879 = vsub.f32 0.0, %v871
    %v880 = vsub.f32 0.0, %v872
    %v881 = vmul.f32 %v873, 1.442695
    %v882 = vpow.pop %v881
    %v883 = vmul.f32 %v874, 1.442695
    %v884 = vpow.pop %v883
    %v885 = vmul.f32 %v875, 1.442695
    %v886 = vpow.pop %v885
    %v887 = vmul.f32 %v876, 1.442695
    %v888 = vpow.pop %v887
    %v889 = vmul.f32 %v877, 1.442695
    %v890 = vpow.pop %v889
    %v891 = vmul.f32 %v878, 1.442695
    %v892 = vpow.pop %v891
    %v893 = vmul.f32 %v879, 1.442695
    %v894 = vpow.pop %v893
    %v895 = vmul.f32 %v880, 1.442695
    %v896 = vpow.pop %v895
    %v897 = vadd.f32 %v882, 1.0
    %v898 = vlog2.pop %v897
    %v899 = vmul.f32 %v898, 0.6931472
    %v900 = vmul.f32 -0.5, %v882
    %v901 = vadd.f32 %v900, 1.0
    %v902 = vmul.f32 %v901, %v882
    %v903 = vand.u32 2147483647, %v882
    %vm904 = vcmp.lt.f32.partialorder %v903, 0.0004427343
    %v905 = vsel %vm904, %v902, %v899
    %v906 = vadd.f32 %v884, 1.0
    %v907 = vlog2.pop %v906
    %v908 = vmul.f32 %v907, 0.6931472
    %v909 = vmul.f32 -0.5, %v884
    %v910 = vadd.f32 %v909, 1.0
    %v911 = vmul.f32 %v910, %v884
    %v912 = vand.u32 2147483647, %v884
    %vm913 = vcmp.lt.f32.partialorder %v912, 0.0004427343
    %v914 = vsel %vm913, %v911, %v908
    %v915 = vadd.f32 %v886, 1.0
    %v916 = vlog2.pop %v915
    %v917 = vmul.f32 %v916, 0.6931472
    %v918 = vmul.f32 -0.5, %v886
    %v919 = vadd.f32 %v918, 1.0
    %v920 = vmul.f32 %v919, %v886
    %v921 = vand.u32 2147483647, %v886
    %vm922 = vcmp.lt.f32.partialorder %v921, 0.0004427343
    %v923 = vsel %vm922, %v920, %v917
    %v924 = vadd.f32 %v888, 1.0
    %v925 = vlog2.pop %v924
    %v926 = vmul.f32 %v925, 0.6931472
    %v927 = vmul.f32 -0.5, %v888
    %v928 = vadd.f32 %v927, 1.0
    %v929 = vmul.f32 %v928, %v888
    %v930 = vand.u32 2147483647, %v888
    %vm931 = vcmp.lt.f32.partialorder %v930, 0.0004427343
    %v932 = vsel %vm931, %v929, %v926
    %v933 = vadd.f32 %v890, 1.0
    %v934 = vlog2.pop %v933
    %v935 = vmul.f32 %v934, 0.6931472
    %v936 = vmul.f32 -0.5, %v890
    %v937 = vadd.f32 %v936, 1.0
    %v938 = vmul.f32 %v937, %v890
    %v939 = vand.u32 2147483647, %v890
    %vm940 = vcmp.lt.f32.partialorder %v939, 0.0004427343
    %v941 = vsel %vm940, %v938, %v935
    %v942 = vadd.f32 %v892, 1.0
    %v943 = vlog2.pop %v942
    %v944 = vmul.f32 %v943, 0.6931472
    %v945 = vmul.f32 -0.5, %v892
    %v946 = vadd.f32 %v945, 1.0
    %v947 = vmul.f32 %v946, %v892
    %v948 = vand.u32 2147483647, %v892
    %vm949 = vcmp.lt.f32.partialorder %v948, 0.0004427343
    %v950 = vsel %vm949, %v947, %v944
    %v951 = vadd.f32 %v894, 1.0
    %v952 = vlog2.pop %v951
    %v953 = vmul.f32 %v952, 0.6931472
    %v954 = vmul.f32 -0.5, %v894
    %v955 = vadd.f32 %v954, 1.0
    %v956 = vmul.f32 %v955, %v894
    %v957 = vand.u32 2147483647, %v894
    %vm958 = vcmp.lt.f32.partialorder %v957, 0.0004427343
    %v959 = vsel %vm958, %v956, %v953
    %v960 = vadd.f32 %v896, 1.0
    %v961 = vlog2.pop %v960
    %v962 = vmul.f32 %v961, 0.6931472
    %v963 = vmul.f32 -0.5, %v896
    %v964 = vadd.f32 %v963, 1.0
    %v965 = vmul.f32 %v964, %v896
    %v966 = vand.u32 2147483647, %v896
    %vm967 = vcmp.lt.f32.partialorder %v966, 0.0004427343
    %v968 = vsel %vm967, %v965, %v962
    %v969 = vadd.f32 %v857, %v905
    %v970 = vadd.f32 %v858, %v914
    %v971 = vadd.f32 %v859, %v923
    %v972 = vadd.f32 %v860, %v932
    %v973 = vadd.f32 %v861, %v941
    %v974 = vadd.f32 %v862, %v950
    %v975 = vadd.f32 %v863, %v959
    %v976 = vadd.f32 %v864, %v968
    %s977 = sld [smem:[#allocation6 + $0x19]]
    %v978 = vstv %s977
    %v979 = vmul.f32 %v978, %v969
    %v980 = vmul.f32 %v978, %v970
    %v981 = vmul.f32 %v978, %v971
    %v982 = vmul.f32 %v978, %v972
    %v983 = vmul.f32 %v978, %v973
    %v984 = vmul.f32 %v978, %v974
    %v985 = vmul.f32 %v978, %v975
    %v986 = vmul.f32 %v978, %v976
    %v987 = vadd.f32 %v829, %v979
    %v988 = vadd.f32 %v830, %v980
    %v989 = vadd.f32 %v831, %v981
    %v990 = vadd.f32 %v832, %v982
    %v991 = vadd.f32 %v833, %v983
    %v992 = vadd.f32 %v834, %v984
    %v993 = vadd.f32 %v835, %v985
    %v994 = vadd.f32 %v836, %v986
    %s995 = sld [smem:[#allocation6 + $0x6]]
    %v996 = vstv %s995
    %v997 = vmul.f32 %v996, %v37
    %v998 = vmul.f32 %v996, %v38
    %v999 = vmul.f32 %v996, %v39
    %v1000 = vmul.f32 %v996, %v40
    %v1001 = vmul.f32 %v996, %v41
    %v1002 = vmul.f32 %v996, %v42
    %v1003 = vmul.f32 %v996, %v43
    %v1004 = vmul.f32 %v996, %v44
    %s1005 = sld [smem:[#allocation6 + $0x10]]
    %v1006 = vstv %s1005
    %v1007 = vadd.f32 %v997, %v1006
    %v1008 = vadd.f32 %v998, %v1006
    %v1009 = vadd.f32 %v999, %v1006
    %v1010 = vadd.f32 %v1000, %v1006
    %v1011 = vadd.f32 %v1001, %v1006
    %v1012 = vadd.f32 %v1002, %v1006
    %v1013 = vadd.f32 %v1003, %v1006
    %v1014 = vadd.f32 %v1004, %v1006
    %v1015 = vmax.f32 %v1007, 0.0
    %v1016 = vmax.f32 %v1008, 0.0
    %v1017 = vmax.f32 %v1009, 0.0
    %v1018 = vmax.f32 %v1010, 0.0
    %v1019 = vmax.f32 %v1011, 0.0
    %v1020 = vmax.f32 %v1012, 0.0
    %v1021 = vmax.f32 %v1013, 0.0
    %v1022 = vmax.f32 %v1014, 0.0
    %v1023 = vand.u32 2147483647, %v1007
    %v1024 = vand.u32 2147483647, %v1008
    %v1025 = vand.u32 2147483647, %v1009
    %v1026 = vand.u32 2147483647, %v1010
    %v1027 = vand.u32 2147483647, %v1011
    %v1028 = vand.u32 2147483647, %v1012
    %v1029 = vand.u32 2147483647, %v1013
    %v1030 = vand.u32 2147483647, %v1014
    %v1031 = vsub.f32 0.0, %v1023
    %v1032 = vsub.f32 0.0, %v1024
    %v1033 = vsub.f32 0.0, %v1025
    %v1034 = vsub.f32 0.0, %v1026
    %v1035 = vsub.f32 0.0, %v1027
    %v1036 = vsub.f32 0.0, %v1028
    %v1037 = vsub.f32 0.0, %v1029
    %v1038 = vsub.f32 0.0, %v1030
    %v1039 = vmul.f32 %v1031, 1.442695
    %v1040 = vpow.pop %v1039
    %v1041 = vmul.f32 %v1032, 1.442695
    %v1042 = vpow.pop %v1041
    %v1043 = vmul.f32 %v1033, 1.442695
    %v1044 = vpow.pop %v1043
    %v1045 = vmul.f32 %v1034, 1.442695
    %v1046 = vpow.pop %v1045
    %v1047 = vmul.f32 %v1035, 1.442695
    %v1048 = vpow.pop %v1047
    %v1049 = vmul.f32 %v1036, 1.442695
    %v1050 = vpow.pop %v1049
    %v1051 = vmul.f32 %v1037, 1.442695
    %v1052 = vpow.pop %v1051
    %v1053 = vmul.f32 %v1038, 1.442695
    %v1054 = vpow.pop %v1053
    %v1055 = vadd.f32 %v1040, 1.0
    %v1056 = vlog2.pop %v1055
    %v1057 = vmul.f32 %v1056, 0.6931472
    %v1058 = vmul.f32 -0.5, %v1040
    %v1059 = vadd.f32 %v1058, 1.0
    %v1060 = vmul.f32 %v1059, %v1040
    %v1061 = vand.u32 2147483647, %v1040
    %vm1062 = vcmp.lt.f32.partialorder %v1061, 0.0004427343
    %v1063 = vsel %vm1062, %v1060, %v1057
    %v1064 = vadd.f32 %v1042, 1.0
    %v1065 = vlog2.pop %v1064
    %v1066 = vmul.f32 %v1065, 0.6931472
    %v1067 = vmul.f32 -0.5, %v1042
    %v1068 = vadd.f32 %v1067, 1.0
    %v1069 = vmul.f32 %v1068, %v1042
    %v1070 = vand.u32 2147483647, %v1042
    %vm1071 = vcmp.lt.f32.partialorder %v1070, 0.0004427343
    %v1072 = vsel %vm1071, %v1069, %v1066
    %v1073 = vadd.f32 %v1044, 1.0
    %v1074 = vlog2.pop %v1073
    %v1075 = vmul.f32 %v1074, 0.6931472
    %v1076 = vmul.f32 -0.5, %v1044
    %v1077 = vadd.f32 %v1076, 1.0
    %v1078 = vmul.f32 %v1077, %v1044
    %v1079 = vand.u32 2147483647, %v1044
    %vm1080 = vcmp.lt.f32.partialorder %v1079, 0.0004427343
    %v1081 = vsel %vm1080, %v1078, %v1075
    %v1082 = vadd.f32 %v1046, 1.0
    %v1083 = vlog2.pop %v1082
    %v1084 = vmul.f32 %v1083, 0.6931472
    %v1085 = vmul.f32 -0.5, %v1046
    %v1086 = vadd.f32 %v1085, 1.0
    %v1087 = vmul.f32 %v1086, %v1046
    %v1088 = vand.u32 2147483647, %v1046
    %vm1089 = vcmp.lt.f32.partialorder %v1088, 0.0004427343
    %v1090 = vsel %vm1089, %v1087, %v1084
    %v1091 = vadd.f32 %v1048, 1.0
    %v1092 = vlog2.pop %v1091
    %v1093 = vmul.f32 %v1092, 0.6931472
    %v1094 = vmul.f32 -0.5, %v1048
    %v1095 = vadd.f32 %v1094, 1.0
    %v1096 = vmul.f32 %v1095, %v1048
    %v1097 = vand.u32 2147483647, %v1048
    %vm1098 = vcmp.lt.f32.partialorder %v1097, 0.0004427343
    %v1099 = vsel %vm1098, %v1096, %v1093
    %v1100 = vadd.f32 %v1050, 1.0
    %v1101 = vlog2.pop %v1100
    %v1102 = vmul.f32 %v1101, 0.6931472
    %v1103 = vmul.f32 -0.5, %v1050
    %v1104 = vadd.f32 %v1103, 1.0
    %v1105 = vmul.f32 %v1104, %v1050
    %v1106 = vand.u32 2147483647, %v1050
    %vm1107 = vcmp.lt.f32.partialorder %v1106, 0.0004427343
    %v1108 = vsel %vm1107, %v1105, %v1102
    %v1109 = vadd.f32 %v1052, 1.0
    %v1110 = vlog2.pop %v1109
    %v1111 = vmul.f32 %v1110, 0.6931472
    %v1112 = vmul.f32 -0.5, %v1052
    %v1113 = vadd.f32 %v1112, 1.0
    %v1114 = vmul.f32 %v1113, %v1052
    %v1115 = vand.u32 2147483647, %v1052
    %vm1116 = vcmp.lt.f32.partialorder %v1115, 0.0004427343
    %v1117 = vsel %vm1116, %v1114, %v1111
    %v1118 = vadd.f32 %v1054, 1.0
    %v1119 = vlog2.pop %v1118
    %v1120 = vmul.f32 %v1119, 0.6931472
    %v1121 = vmul.f32 -0.5, %v1054
    %v1122 = vadd.f32 %v1121, 1.0
    %v1123 = vmul.f32 %v1122, %v1054
    %v1124 = vand.u32 2147483647, %v1054
    %vm1125 = vcmp.lt.f32.partialorder %v1124, 0.0004427343
    %v1126 = vsel %vm1125, %v1123, %v1120
    %v1127 = vadd.f32 %v1015, %v1063
    %v1128 = vadd.f32 %v1016, %v1072
    %v1129 = vadd.f32 %v1017, %v1081
    %v1130 = vadd.f32 %v1018, %v1090
    %v1131 = vadd.f32 %v1019, %v1099
    %v1132 = vadd.f32 %v1020, %v1108
    %v1133 = vadd.f32 %v1021, %v1117
    %v1134 = vadd.f32 %v1022, %v1126
    %s1135 = sld [smem:[#allocation6 + $0x1a]]
    %v1136 = vstv %s1135
    %v1137 = vmul.f32 %v1136, %v1127
    %v1138 = vmul.f32 %v1136, %v1128
    %v1139 = vmul.f32 %v1136, %v1129
    %v1140 = vmul.f32 %v1136, %v1130
    %v1141 = vmul.f32 %v1136, %v1131
    %v1142 = vmul.f32 %v1136, %v1132
    %v1143 = vmul.f32 %v1136, %v1133
    %v1144 = vmul.f32 %v1136, %v1134
    %v1145 = vadd.f32 %v987, %v1137
    %v1146 = vadd.f32 %v988, %v1138
    %v1147 = vadd.f32 %v989, %v1139
    %v1148 = vadd.f32 %v990, %v1140
    %v1149 = vadd.f32 %v991, %v1141
    %v1150 = vadd.f32 %v992, %v1142
    %v1151 = vadd.f32 %v993, %v1143
    %v1152 = vadd.f32 %v994, %v1144
    %s1153 = sld [smem:[#allocation6 + $0x7]]
    %v1154 = vstv %s1153
    %v1155 = vmul.f32 %v1154, %v37
    %v1156 = vmul.f32 %v1154, %v38
    %v1157 = vmul.f32 %v1154, %v39
    %v1158 = vmul.f32 %v1154, %v40
    %v1159 = vmul.f32 %v1154, %v41
    %v1160 = vmul.f32 %v1154, %v42
    %v1161 = vmul.f32 %v1154, %v43
    %v1162 = vmul.f32 %v1154, %v44
    %s1163 = sld [smem:[#allocation6 + $0x11]]
    %v1164 = vstv %s1163
    %v1165 = vadd.f32 %v1155, %v1164
    %v1166 = vadd.f32 %v1156, %v1164
    %v1167 = vadd.f32 %v1157, %v1164
    %v1168 = vadd.f32 %v1158, %v1164
    %v1169 = vadd.f32 %v1159, %v1164
    %v1170 = vadd.f32 %v1160, %v1164
    %v1171 = vadd.f32 %v1161, %v1164
    %v1172 = vadd.f32 %v1162, %v1164
    %v1173 = vmax.f32 %v1165, 0.0
    %v1174 = vmax.f32 %v1166, 0.0
    %v1175 = vmax.f32 %v1167, 0.0
    %v1176 = vmax.f32 %v1168, 0.0
    %v1177 = vmax.f32 %v1169, 0.0
    %v1178 = vmax.f32 %v1170, 0.0
    %v1179 = vmax.f32 %v1171, 0.0
    %v1180 = vmax.f32 %v1172, 0.0
    %v1181 = vand.u32 2147483647, %v1165
    %v1182 = vand.u32 2147483647, %v1166
    %v1183 = vand.u32 2147483647, %v1167
    %v1184 = vand.u32 2147483647, %v1168
    %v1185 = vand.u32 2147483647, %v1169
    %v1186 = vand.u32 2147483647, %v1170
    %v1187 = vand.u32 2147483647, %v1171
    %v1188 = vand.u32 2147483647, %v1172
    %v1189 = vsub.f32 0.0, %v1181
    %v1190 = vsub.f32 0.0, %v1182
    %v1191 = vsub.f32 0.0, %v1183
    %v1192 = vsub.f32 0.0, %v1184
    %v1193 = vsub.f32 0.0, %v1185
    %v1194 = vsub.f32 0.0, %v1186
    %v1195 = vsub.f32 0.0, %v1187
    %v1196 = vsub.f32 0.0, %v1188
    %v1197 = vmul.f32 %v1189, 1.442695
    %v1198 = vpow.pop %v1197
    %v1199 = vmul.f32 %v1190, 1.442695
    %v1200 = vpow.pop %v1199
    %v1201 = vmul.f32 %v1191, 1.442695
    %v1202 = vpow.pop %v1201
    %v1203 = vmul.f32 %v1192, 1.442695
    %v1204 = vpow.pop %v1203
    %v1205 = vmul.f32 %v1193, 1.442695
    %v1206 = vpow.pop %v1205
    %v1207 = vmul.f32 %v1194, 1.442695
    %v1208 = vpow.pop %v1207
    %v1209 = vmul.f32 %v1195, 1.442695
    %v1210 = vpow.pop %v1209
    %v1211 = vmul.f32 %v1196, 1.442695
    %v1212 = vpow.pop %v1211
    %v1213 = vadd.f32 %v1198, 1.0
    %v1214 = vlog2.pop %v1213
    %v1215 = vmul.f32 %v1214, 0.6931472
    %v1216 = vmul.f32 -0.5, %v1198
    %v1217 = vadd.f32 %v1216, 1.0
    %v1218 = vmul.f32 %v1217, %v1198
    %v1219 = vand.u32 2147483647, %v1198
    %vm1220 = vcmp.lt.f32.partialorder %v1219, 0.0004427343
    %v1221 = vsel %vm1220, %v1218, %v1215
    %v1222 = vadd.f32 %v1200, 1.0
    %v1223 = vlog2.pop %v1222
    %v1224 = vmul.f32 %v1223, 0.6931472
    %v1225 = vmul.f32 -0.5, %v1200
    %v1226 = vadd.f32 %v1225, 1.0
    %v1227 = vmul.f32 %v1226, %v1200
    %v1228 = vand.u32 2147483647, %v1200
    %vm1229 = vcmp.lt.f32.partialorder %v1228, 0.0004427343
    %v1230 = vsel %vm1229, %v1227, %v1224
    %v1231 = vadd.f32 %v1202, 1.0
    %v1232 = vlog2.pop %v1231
    %v1233 = vmul.f32 %v1232, 0.6931472
    %v1234 = vmul.f32 -0.5, %v1202
    %v1235 = vadd.f32 %v1234, 1.0
    %v1236 = vmul.f32 %v1235, %v1202
    %v1237 = vand.u32 2147483647, %v1202
    %vm1238 = vcmp.lt.f32.partialorder %v1237, 0.0004427343
    %v1239 = vsel %vm1238, %v1236, %v1233
    %v1240 = vadd.f32 %v1204, 1.0
    %v1241 = vlog2.pop %v1240
    %v1242 = vmul.f32 %v1241, 0.6931472
    %v1243 = vmul.f32 -0.5, %v1204
    %v1244 = vadd.f32 %v1243, 1.0
    %v1245 = vmul.f32 %v1244, %v1204
    %v1246 = vand.u32 2147483647, %v1204
    %vm1247 = vcmp.lt.f32.partialorder %v1246, 0.0004427343
    %v1248 = vsel %vm1247, %v1245, %v1242
    %v1249 = vadd.f32 %v1206, 1.0
    %v1250 = vlog2.pop %v1249
    %v1251 = vmul.f32 %v1250, 0.6931472
    %v1252 = vmul.f32 -0.5, %v1206
    %v1253 = vadd.f32 %v1252, 1.0
    %v1254 = vmul.f32 %v1253, %v1206
    %v1255 = vand.u32 2147483647, %v1206
    %vm1256 = vcmp.lt.f32.partialorder %v1255, 0.0004427343
    %v1257 = vsel %vm1256, %v1254, %v1251
    %v1258 = vadd.f32 %v1208, 1.0
    %v1259 = vlog2.pop %v1258
    %v1260 = vmul.f32 %v1259, 0.6931472
    %v1261 = vmul.f32 -0.5, %v1208
    %v1262 = vadd.f32 %v1261, 1.0
    %v1263 = vmul.f32 %v1262, %v1208
    %v1264 = vand.u32 2147483647, %v1208
    %vm1265 = vcmp.lt.f32.partialorder %v1264, 0.0004427343
    %v1266 = vsel %vm1265, %v1263, %v1260
    %v1267 = vadd.f32 %v1210, 1.0
    %v1268 = vlog2.pop %v1267
    %v1269 = vmul.f32 %v1268, 0.6931472
    %v1270 = vmul.f32 -0.5, %v1210
    %v1271 = vadd.f32 %v1270, 1.0
    %v1272 = vmul.f32 %v1271, %v1210
    %v1273 = vand.u32 2147483647, %v1210
    %vm1274 = vcmp.lt.f32.partialorder %v1273, 0.0004427343
    %v1275 = vsel %vm1274, %v1272, %v1269
    %v1276 = vadd.f32 %v1212, 1.0
    %v1277 = vlog2.pop %v1276
    %v1278 = vmul.f32 %v1277, 0.6931472
    %v1279 = vmul.f32 -0.5, %v1212
    %v1280 = vadd.f32 %v1279, 1.0
    %v1281 = vmul.f32 %v1280, %v1212
    %v1282 = vand.u32 2147483647, %v1212
    %vm1283 = vcmp.lt.f32.partialorder %v1282, 0.0004427343
    %v1284 = vsel %vm1283, %v1281, %v1278
    %v1285 = vadd.f32 %v1173, %v1221
    %v1286 = vadd.f32 %v1174, %v1230
    %v1287 = vadd.f32 %v1175, %v1239
    %v1288 = vadd.f32 %v1176, %v1248
    %v1289 = vadd.f32 %v1177, %v1257
    %v1290 = vadd.f32 %v1178, %v1266
    %v1291 = vadd.f32 %v1179, %v1275
    %v1292 = vadd.f32 %v1180, %v1284
    %s1293 = sld [smem:[#allocation6 + $0x1b]]
    %v1294 = vstv %s1293
    %v1295 = vmul.f32 %v1294, %v1285
    %v1296 = vmul.f32 %v1294, %v1286
    %v1297 = vmul.f32 %v1294, %v1287
    %v1298 = vmul.f32 %v1294, %v1288
    %v1299 = vmul.f32 %v1294, %v1289
    %v1300 = vmul.f32 %v1294, %v1290
    %v1301 = vmul.f32 %v1294, %v1291
    %v1302 = vmul.f32 %v1294, %v1292
    %v1303 = vadd.f32 %v1145, %v1295
    %v1304 = vadd.f32 %v1146, %v1296
    %v1305 = vadd.f32 %v1147, %v1297
    %v1306 = vadd.f32 %v1148, %v1298
    %v1307 = vadd.f32 %v1149, %v1299
    %v1308 = vadd.f32 %v1150, %v1300
    %v1309 = vadd.f32 %v1151, %v1301
    %v1310 = vadd.f32 %v1152, %v1302
    %s1311 = sld [smem:[#allocation6 + $0x8]]
    %v1312 = vstv %s1311
    %v1313 = vmul.f32 %v1312, %v37
    %v1314 = vmul.f32 %v1312, %v38
    %v1315 = vmul.f32 %v1312, %v39
    %v1316 = vmul.f32 %v1312, %v40
    %v1317 = vmul.f32 %v1312, %v41
    %v1318 = vmul.f32 %v1312, %v42
    %v1319 = vmul.f32 %v1312, %v43
    %v1320 = vmul.f32 %v1312, %v44
    %s1321 = sld [smem:[#allocation6 + $0x12]]
    %v1322 = vstv %s1321
    %v1323 = vadd.f32 %v1313, %v1322
    %v1324 = vadd.f32 %v1314, %v1322
    %v1325 = vadd.f32 %v1315, %v1322
    %v1326 = vadd.f32 %v1316, %v1322
    %v1327 = vadd.f32 %v1317, %v1322
    %v1328 = vadd.f32 %v1318, %v1322
    %v1329 = vadd.f32 %v1319, %v1322
    %v1330 = vadd.f32 %v1320, %v1322
    %v1331 = vmax.f32 %v1323, 0.0
    %v1332 = vmax.f32 %v1324, 0.0
    %v1333 = vmax.f32 %v1325, 0.0
    %v1334 = vmax.f32 %v1326, 0.0
    %v1335 = vmax.f32 %v1327, 0.0
    %v1336 = vmax.f32 %v1328, 0.0
    %v1337 = vmax.f32 %v1329, 0.0
    %v1338 = vmax.f32 %v1330, 0.0
    %v1339 = vand.u32 2147483647, %v1323
    %v1340 = vand.u32 2147483647, %v1324
    %v1341 = vand.u32 2147483647, %v1325
    %v1342 = vand.u32 2147483647, %v1326
    %v1343 = vand.u32 2147483647, %v1327
    %v1344 = vand.u32 2147483647, %v1328
    %v1345 = vand.u32 2147483647, %v1329
    %v1346 = vand.u32 2147483647, %v1330
    %v1347 = vsub.f32 0.0, %v1339
    %v1348 = vsub.f32 0.0, %v1340
    %v1349 = vsub.f32 0.0, %v1341
    %v1350 = vsub.f32 0.0, %v1342
    %v1351 = vsub.f32 0.0, %v1343
    %v1352 = vsub.f32 0.0, %v1344
    %v1353 = vsub.f32 0.0, %v1345
    %v1354 = vsub.f32 0.0, %v1346
    %v1355 = vmul.f32 %v1347, 1.442695
    %v1356 = vpow.pop %v1355
    %v1357 = vmul.f32 %v1348, 1.442695
    %v1358 = vpow.pop %v1357
    %v1359 = vmul.f32 %v1349, 1.442695
    %v1360 = vpow.pop %v1359
    %v1361 = vmul.f32 %v1350, 1.442695
    %v1362 = vpow.pop %v1361
    %v1363 = vmul.f32 %v1351, 1.442695
    %v1364 = vpow.pop %v1363
    %v1365 = vmul.f32 %v1352, 1.442695
    %v1366 = vpow.pop %v1365
    %v1367 = vmul.f32 %v1353, 1.442695
    %v1368 = vpow.pop %v1367
    %v1369 = vmul.f32 %v1354, 1.442695
    %v1370 = vpow.pop %v1369
    %v1371 = vadd.f32 %v1356, 1.0
    %v1372 = vlog2.pop %v1371
    %v1373 = vmul.f32 %v1372, 0.6931472
    %v1374 = vmul.f32 -0.5, %v1356
    %v1375 = vadd.f32 %v1374, 1.0
    %v1376 = vmul.f32 %v1375, %v1356
    %v1377 = vand.u32 2147483647, %v1356
    %vm1378 = vcmp.lt.f32.partialorder %v1377, 0.0004427343
    %v1379 = vsel %vm1378, %v1376, %v1373
    %v1380 = vadd.f32 %v1358, 1.0
    %v1381 = vlog2.pop %v1380
    %v1382 = vmul.f32 %v1381, 0.6931472
    %v1383 = vmul.f32 -0.5, %v1358
    %v1384 = vadd.f32 %v1383, 1.0
    %v1385 = vmul.f32 %v1384, %v1358
    %v1386 = vand.u32 2147483647, %v1358
    %vm1387 = vcmp.lt.f32.partialorder %v1386, 0.0004427343
    %v1388 = vsel %vm1387, %v1385, %v1382
    %v1389 = vadd.f32 %v1360, 1.0
    %v1390 = vlog2.pop %v1389
    %v1391 = vmul.f32 %v1390, 0.6931472
    %v1392 = vmul.f32 -0.5, %v1360
    %v1393 = vadd.f32 %v1392, 1.0
    %v1394 = vmul.f32 %v1393, %v1360
    %v1395 = vand.u32 2147483647, %v1360
    %vm1396 = vcmp.lt.f32.partialorder %v1395, 0.0004427343
    %v1397 = vsel %vm1396, %v1394, %v1391
    %v1398 = vadd.f32 %v1362, 1.0
    %v1399 = vlog2.pop %v1398
    %v1400 = vmul.f32 %v1399, 0.6931472
    %v1401 = vmul.f32 -0.5, %v1362
    %v1402 = vadd.f32 %v1401, 1.0
    %v1403 = vmul.f32 %v1402, %v1362
    %v1404 = vand.u32 2147483647, %v1362
    %vm1405 = vcmp.lt.f32.partialorder %v1404, 0.0004427343
    %v1406 = vsel %vm1405, %v1403, %v1400
    %v1407 = vadd.f32 %v1364, 1.0
    %v1408 = vlog2.pop %v1407
    %v1409 = vmul.f32 %v1408, 0.6931472
    %v1410 = vmul.f32 -0.5, %v1364
    %v1411 = vadd.f32 %v1410, 1.0
    %v1412 = vmul.f32 %v1411, %v1364
    %v1413 = vand.u32 2147483647, %v1364
    %vm1414 = vcmp.lt.f32.partialorder %v1413, 0.0004427343
    %v1415 = vsel %vm1414, %v1412, %v1409
    %v1416 = vadd.f32 %v1366, 1.0
    %v1417 = vlog2.pop %v1416
    %v1418 = vmul.f32 %v1417, 0.6931472
    %v1419 = vmul.f32 -0.5, %v1366
    %v1420 = vadd.f32 %v1419, 1.0
    %v1421 = vmul.f32 %v1420, %v1366
    %v1422 = vand.u32 2147483647, %v1366
    %vm1423 = vcmp.lt.f32.partialorder %v1422, 0.0004427343
    %v1424 = vsel %vm1423, %v1421, %v1418
    %v1425 = vadd.f32 %v1368, 1.0
    %v1426 = vlog2.pop %v1425
    %v1427 = vmul.f32 %v1426, 0.6931472
    %v1428 = vmul.f32 -0.5, %v1368
    %v1429 = vadd.f32 %v1428, 1.0
    %v1430 = vmul.f32 %v1429, %v1368
    %v1431 = vand.u32 2147483647, %v1368
    %vm1432 = vcmp.lt.f32.partialorder %v1431, 0.0004427343
    %v1433 = vsel %vm1432, %v1430, %v1427
    %v1434 = vadd.f32 %v1370, 1.0
    %v1435 = vlog2.pop %v1434
    %v1436 = vmul.f32 %v1435, 0.6931472
    %v1437 = vmul.f32 -0.5, %v1370
    %v1438 = vadd.f32 %v1437, 1.0
    %v1439 = vmul.f32 %v1438, %v1370
    %v1440 = vand.u32 2147483647, %v1370
    %vm1441 = vcmp.lt.f32.partialorder %v1440, 0.0004427343
    %v1442 = vsel %vm1441, %v1439, %v1436
    %v1443 = vadd.f32 %v1331, %v1379
    %v1444 = vadd.f32 %v1332, %v1388
    %v1445 = vadd.f32 %v1333, %v1397
    %v1446 = vadd.f32 %v1334, %v1406
    %v1447 = vadd.f32 %v1335, %v1415
    %v1448 = vadd.f32 %v1336, %v1424
    %v1449 = vadd.f32 %v1337, %v1433
    %v1450 = vadd.f32 %v1338, %v1442
    %s1451 = sld [smem:[#allocation6 + $0x1c]]
    %v1452 = vstv %s1451
    %v1453 = vmul.f32 %v1452, %v1443
    %v1454 = vmul.f32 %v1452, %v1444
    %v1455 = vmul.f32 %v1452, %v1445
    %v1456 = vmul.f32 %v1452, %v1446
    %v1457 = vmul.f32 %v1452, %v1447
    %v1458 = vmul.f32 %v1452, %v1448
    %v1459 = vmul.f32 %v1452, %v1449
    %v1460 = vmul.f32 %v1452, %v1450
    %v1461 = vadd.f32 %v1303, %v1453
    %v1462 = vadd.f32 %v1304, %v1454
    %v1463 = vadd.f32 %v1305, %v1455
    %v1464 = vadd.f32 %v1306, %v1456
    %v1465 = vadd.f32 %v1307, %v1457
    %v1466 = vadd.f32 %v1308, %v1458
    %v1467 = vadd.f32 %v1309, %v1459
    %v1468 = vadd.f32 %v1310, %v1460
    %s1469 = sld [smem:[#allocation6 + $0x9]]
    %v1470 = vstv %s1469
    %v1471 = vmul.f32 %v1470, %v37
    %v1472 = vmul.f32 %v1470, %v38
    %v1473 = vmul.f32 %v1470, %v39
    %v1474 = vmul.f32 %v1470, %v40
    %v1475 = vmul.f32 %v1470, %v41
    %v1476 = vmul.f32 %v1470, %v42
    %v1477 = vmul.f32 %v1470, %v43
    %v1478 = vmul.f32 %v1470, %v44
    %s1479 = sld [smem:[#allocation6 + $0x13]]
    %v1480 = vstv %s1479
    %v1481 = vadd.f32 %v1471, %v1480
    %v1482 = vadd.f32 %v1472, %v1480
    %v1483 = vadd.f32 %v1473, %v1480
    %v1484 = vadd.f32 %v1474, %v1480
    %v1485 = vadd.f32 %v1475, %v1480
    %v1486 = vadd.f32 %v1476, %v1480
    %v1487 = vadd.f32 %v1477, %v1480
    %v1488 = vadd.f32 %v1478, %v1480
    %v1489 = vmax.f32 %v1481, 0.0
    %v1490 = vmax.f32 %v1482, 0.0
    %v1491 = vmax.f32 %v1483, 0.0
    %v1492 = vmax.f32 %v1484, 0.0
    %v1493 = vmax.f32 %v1485, 0.0
    %v1494 = vmax.f32 %v1486, 0.0
    %v1495 = vmax.f32 %v1487, 0.0
    %v1496 = vmax.f32 %v1488, 0.0
    %v1497 = vand.u32 2147483647, %v1481
    %v1498 = vand.u32 2147483647, %v1482
    %v1499 = vand.u32 2147483647, %v1483
    %v1500 = vand.u32 2147483647, %v1484
    %v1501 = vand.u32 2147483647, %v1485
    %v1502 = vand.u32 2147483647, %v1486
    %v1503 = vand.u32 2147483647, %v1487
    %v1504 = vand.u32 2147483647, %v1488
    %v1505 = vsub.f32 0.0, %v1497
    %v1506 = vsub.f32 0.0, %v1498
    %v1507 = vsub.f32 0.0, %v1499
    %v1508 = vsub.f32 0.0, %v1500
    %v1509 = vsub.f32 0.0, %v1501
    %v1510 = vsub.f32 0.0, %v1502
    %v1511 = vsub.f32 0.0, %v1503
    %v1512 = vsub.f32 0.0, %v1504
    %v1513 = vmul.f32 %v1505, 1.442695
    %v1514 = vpow.pop %v1513
    %v1515 = vmul.f32 %v1506, 1.442695
    %v1516 = vpow.pop %v1515
    %v1517 = vmul.f32 %v1507, 1.442695
    %v1518 = vpow.pop %v1517
    %v1519 = vmul.f32 %v1508, 1.442695
    %v1520 = vpow.pop %v1519
    %v1521 = vmul.f32 %v1509, 1.442695
    %v1522 = vpow.pop %v1521
    %v1523 = vmul.f32 %v1510, 1.442695
    %v1524 = vpow.pop %v1523
    %v1525 = vmul.f32 %v1511, 1.442695
    %v1526 = vpow.pop %v1525
    %v1527 = vmul.f32 %v1512, 1.442695
    %v1528 = vpow.pop %v1527
    %v1529 = vadd.f32 %v1514, 1.0
    %v1530 = vlog2.pop %v1529
    %v1531 = vmul.f32 %v1530, 0.6931472
    %v1532 = vmul.f32 -0.5, %v1514
    %v1533 = vadd.f32 %v1532, 1.0
    %v1534 = vmul.f32 %v1533, %v1514
    %v1535 = vand.u32 2147483647, %v1514
    %vm1536 = vcmp.lt.f32.partialorder %v1535, 0.0004427343
    %v1537 = vsel %vm1536, %v1534, %v1531
    %v1538 = vadd.f32 %v1516, 1.0
    %v1539 = vlog2.pop %v1538
    %v1540 = vmul.f32 %v1539, 0.6931472
    %v1541 = vmul.f32 -0.5, %v1516
    %v1542 = vadd.f32 %v1541, 1.0
    %v1543 = vmul.f32 %v1542, %v1516
    %v1544 = vand.u32 2147483647, %v1516
    %vm1545 = vcmp.lt.f32.partialorder %v1544, 0.0004427343
    %v1546 = vsel %vm1545, %v1543, %v1540
    %v1547 = vadd.f32 %v1518, 1.0
    %v1548 = vlog2.pop %v1547
    %v1549 = vmul.f32 %v1548, 0.6931472
    %v1550 = vmul.f32 -0.5, %v1518
    %v1551 = vadd.f32 %v1550, 1.0
    %v1552 = vmul.f32 %v1551, %v1518
    %v1553 = vand.u32 2147483647, %v1518
    %vm1554 = vcmp.lt.f32.partialorder %v1553, 0.0004427343
    %v1555 = vsel %vm1554, %v1552, %v1549
    %v1556 = vadd.f32 %v1520, 1.0
    %v1557 = vlog2.pop %v1556
    %v1558 = vmul.f32 %v1557, 0.6931472
    %v1559 = vmul.f32 -0.5, %v1520
    %v1560 = vadd.f32 %v1559, 1.0
    %v1561 = vmul.f32 %v1560, %v1520
    %v1562 = vand.u32 2147483647, %v1520
    %vm1563 = vcmp.lt.f32.partialorder %v1562, 0.0004427343
    %v1564 = vsel %vm1563, %v1561, %v1558
    %v1565 = vadd.f32 %v1522, 1.0
    %v1566 = vlog2.pop %v1565
    %v1567 = vmul.f32 %v1566, 0.6931472
    %v1568 = vmul.f32 -0.5, %v1522
    %v1569 = vadd.f32 %v1568, 1.0
    %v1570 = vmul.f32 %v1569, %v1522
    %v1571 = vand.u32 2147483647, %v1522
    %vm1572 = vcmp.lt.f32.partialorder %v1571, 0.0004427343
    %v1573 = vsel %vm1572, %v1570, %v1567
    %v1574 = vadd.f32 %v1524, 1.0
    %v1575 = vlog2.pop %v1574
    %v1576 = vmul.f32 %v1575, 0.6931472
    %v1577 = vmul.f32 -0.5, %v1524
    %v1578 = vadd.f32 %v1577, 1.0
    %v1579 = vmul.f32 %v1578, %v1524
    %v1580 = vand.u32 2147483647, %v1524
    %vm1581 = vcmp.lt.f32.partialorder %v1580, 0.0004427343
    %v1582 = vsel %vm1581, %v1579, %v1576
    %v1583 = vadd.f32 %v1526, 1.0
    %v1584 = vlog2.pop %v1583
    %v1585 = vmul.f32 %v1584, 0.6931472
    %v1586 = vmul.f32 -0.5, %v1526
    %v1587 = vadd.f32 %v1586, 1.0
    %v1588 = vmul.f32 %v1587, %v1526
    %v1589 = vand.u32 2147483647, %v1526
    %vm1590 = vcmp.lt.f32.partialorder %v1589, 0.0004427343
    %v1591 = vsel %vm1590, %v1588, %v1585
    %v1592 = vadd.f32 %v1528, 1.0
    %v1593 = vlog2.pop %v1592
    %v1594 = vmul.f32 %v1593, 0.6931472
    %v1595 = vmul.f32 -0.5, %v1528
    %v1596 = vadd.f32 %v1595, 1.0
    %v1597 = vmul.f32 %v1596, %v1528
    %v1598 = vand.u32 2147483647, %v1528
    %vm1599 = vcmp.lt.f32.partialorder %v1598, 0.0004427343
    %v1600 = vsel %vm1599, %v1597, %v1594
    %v1601 = vadd.f32 %v1489, %v1537
    %v1602 = vadd.f32 %v1490, %v1546
    %v1603 = vadd.f32 %v1491, %v1555
    %v1604 = vadd.f32 %v1492, %v1564
    %v1605 = vadd.f32 %v1493, %v1573
    %v1606 = vadd.f32 %v1494, %v1582
    %v1607 = vadd.f32 %v1495, %v1591
    %v1608 = vadd.f32 %v1496, %v1600
    %s1609 = sld [smem:[#allocation6 + $0x1d]]
    %v1610 = vstv %s1609
    %v1611 = vmul.f32 %v1610, %v1601
    %v1612 = vmul.f32 %v1610, %v1602
    %v1613 = vmul.f32 %v1610, %v1603
    %v1614 = vmul.f32 %v1610, %v1604
    %v1615 = vmul.f32 %v1610, %v1605
    %v1616 = vmul.f32 %v1610, %v1606
    %v1617 = vmul.f32 %v1610, %v1607
    %v1618 = vmul.f32 %v1610, %v1608
    %v1619 = vadd.f32 %v1461, %v1611
    %v1620 = vadd.f32 %v1462, %v1612
    %v1621 = vadd.f32 %v1463, %v1613
    %v1622 = vadd.f32 %v1464, %v1614
    %v1623 = vadd.f32 %v1465, %v1615
    %v1624 = vadd.f32 %v1466, %v1616
    %v1625 = vadd.f32 %v1467, %v1617
    %v1626 = vadd.f32 %v1468, %v1618
    %1627 = vst [vmem:[#allocation7] sm:$0xff] %v1619
    %1628 = vst [vmem:[#allocation7 + $0x8] sm:$0xff] %v1620
    %1629 = vst [vmem:[#allocation7 + $0x10] sm:$0xff] %v1621
    %1630 = vst [vmem:[#allocation7 + $0x18] sm:$0xff] %v1622
    %1631 = vst [vmem:[#allocation7 + $0x20] sm:$0xff] %v1623
    %1632 = vst [vmem:[#allocation7 + $0x28] sm:$0xff] %v1624
    %1633 = vst [vmem:[#allocation7 + $0x30] sm:$0xff] %v1625
    %1634 = vst [vmem:[#allocation7 + $0x38] sm:$0xff] %v1626
    // Predicated region
    $region18: #{tpu_custom_call.1} parent=1 // pred_check
      _
    $region19: #{tpu_custom_call.1} parent=1 // pred_check_branch
      %1636 = sbr.rel (0) target = $region21
    $region20: #{tpu_custom_call.1} parent=1 // pred_region
      %s1638 = ssub.s32 1024, 1024
      %1639 = vsyncadd [#allocation4], %s1638
      %s1641 = sshll.u32 [#allocation7], 4
      %s1642 = int_to_ptr.vmem [resolvable:$true] %s1641
      %1644 = dma.vmem_to_hbm [thread:$0]  %s1642, 1024, %s2, [#allocation4]
    $region21: #{tpu_custom_call.1} parent=1 // pred_fallthru
      _
    // Predicated region
    $region22: #{tpu_custom_call.1} parent=1 // pred_check
      _
    $region23: #{tpu_custom_call.1} parent=1 // pred_check_branch
      %1646 = sbr.rel (0) target = $region25
    $region24: #{tpu_custom_call.1} parent=1 // pred_region
      %1647 = dma.done [#allocation4], 1024
    $region25: #{tpu_custom_call.1} parent=1 // pred_fallthru
      _
    %1648 = vsyncpa [#allocation3], 1
    %1649 = vsyncpa [#allocation4], 1
    %1650 = vsyncpa [#allocation5], 1

</llo_original>
